<compile_context>
chip_gen: v5e
topology: v5e:2x2
jax: 0.10.0
libtpu: 0.0.40
codegen_flags: <defaults>
</compile_context>

<pallas_src>
import functools

import jax
import jax.numpy as jnp
from jax.experimental import pallas as pl
from jax.experimental.pallas import tpu as pltpu

EPS = 1e-5
DIM_FEEDFORWARD = 2048   # fixed in the PyTorch module
OUT_PAD = 128            # lane-dense padded width for the final linear output


def _layernorm(x, w, b):
    # two-pass mean / mean-of-squared-deviation (PyTorch-like numerics, no cancellation)
    mu = jnp.mean(x, axis=-1, keepdims=True)
    d = x - mu
    var = jnp.mean(d * d, axis=-1, keepdims=True)
    return d * jax.lax.rsqrt(var + EPS) * w + b


def fused_decoder_kernel(x_ref, w_sa_ref, w1_ref, w2_ref, b1_ref, vec_ref,
                         lin_w_ref, lin_b_ref, o_ref):
    """Whole network in one invocation: all weights resident in VMEM.

    Shapes (all whole-array VMEM blocks):
      x_ref     (B, E)        f32
      w_sa_ref  (L, E, E)     bf16   fused  x @ W_sa  == out_proj(V_proj(x))
      w1_ref    (L, E, FF)    bf16   FFN up  (pre-transposed)
      w2_ref    (L, E, FF)    bf16   FFN down, lane-dense; contract over FF
      b1_ref    (L, 1, FF)    f32
      vec_ref   (L, 8, E)     f32    rows: b_sa, ln1w, ln1b, ln2w, ln2b, b2, ln3w, ln3b
      lin_w_ref (E, OUT_PAD)  bf16   final linear, lane-padded
      lin_b_ref (1, OUT_PAD)  f32
      o_ref     (B, OUT_PAD)  f32
    """
    num_layers = w_sa_ref.shape[0]

    def layer(l, x):
        vecs = vec_ref[l]                                   # (8, E) f32
        # --- self-attention block (seq_len == 1 -> attention weights identically 1) ---
        xb = x.astype(jnp.bfloat16)
        sa = jnp.dot(xb, w_sa_ref[l],
                     preferred_element_type=jnp.float32) + vecs[0:1, :]
        x = _layernorm(x + sa, vecs[1:2, :], vecs[2:3, :])
        # --- cross-attention block ---
        # TODO(synk): memory=None in the PyTorch forward; cross-attn contribution skipped.
        x = _layernorm(x, vecs[3:4, :], vecs[4:5, :])
        # --- feed-forward block (ReLU, E -> 2048 -> E) ---
        xb = x.astype(jnp.bfloat16)
        h = jnp.dot(xb, w1_ref[l], preferred_element_type=jnp.float32) + b1_ref[l]
        h = jnp.maximum(h, 0.0).astype(jnp.bfloat16)
        ff = jax.lax.dot_general(h, w2_ref[l], (((1,), (1,)), ((), ())),
                                 preferred_element_type=jnp.float32) + vecs[5:6, :]
        x = _layernorm(x + ff, vecs[6:7, :], vecs[7:8, :])
        return x

    x = jax.lax.fori_loop(0, num_layers, layer, x_ref[...], unroll=True)

    # --- fused final nn.Linear (lane-dense padded output) ---
    o_ref[...] = (jnp.dot(x.astype(jnp.bfloat16), lin_w_ref[...],
                          preferred_element_type=jnp.float32) + lin_b_ref[...])


@functools.partial(jax.jit, static_argnums=(2,))
def quantity_decoder_forward(x, params, output_size):
    """x: (B, embed_size) float32 -> (B, output_size) float32."""
    B, _ = x.shape
    out_pad = params["lin_w_t"].shape[1]

    vmem = lambda: pl.BlockSpec(memory_space=pltpu.MemorySpace.VMEM)

    out = pl.pallas_call(
        fused_decoder_kernel,
        out_shape=jax.ShapeDtypeStruct((B, out_pad), jnp.float32),
        in_specs=[vmem() for _ in range(8)],
        out_specs=vmem(),
        compiler_params=pltpu.CompilerParams(
            # Actual usage here is <1 MiB; cap kept well under v7x's 64 MiB VMEM.
            vmem_limit_bytes=48 << 20),
    )(x,
      params["w_sa"], params["w1_t"], params["w2"], params["b1"],
      params["vecs"], params["lin_w_t"], params["lin_b"])
    return out[:, :output_size]


def init_params(key, embed_size, output_size, num_layers, out_pad=OUT_PAD):
    """Deterministic synthetic weights matching the PyTorch module's shapes,
    stacked with a leading num_layers axis; matmul weights shipped in bf16."""
    ff = DIM_FEEDFORWARD
    L, E = num_layers, embed_size
    keys = jax.random.split(key, 10)

    def nrm(k, shape, scale=0.05):
        return (scale * jax.random.normal(k, shape)).astype(jnp.float32)

    # PyTorch-convention weights (only the V slice of MHA's in_proj matters at S==1).
    wv = nrm(keys[0], (L, E, E));  bv = nrm(keys[1], (L, E))      # V = x @ wv.T + bv
    wo = nrm(keys[2], (L, E, E));  bo = nrm(keys[3], (L, E))      # sa = V @ wo.T + bo
    w1 = nrm(keys[4], (L, ff, E)); b1 = nrm(keys[5], (L, ff))     # h  = x @ w1.T + b1
    w2 = nrm(keys[6], (L, E, ff), scale=0.02)                     # ff = h @ w2.T + b2
    b2 = nrm(keys[7], (L, E))
    wlin = nrm(keys[8], (output_size, E)); blin = nrm(keys[9], (output_size,))

    # Fold the S==1 attention: sa = x @ (wv.T @ wo.T) + (bv @ wo.T + bo).  f32 -> bf16.
    w_sa = jnp.einsum('lij,ljk->lik',
                      jnp.swapaxes(wv, -1, -2), jnp.swapaxes(wo, -1, -2))
    b_sa = jnp.einsum('lj,lkj->lk', bv, wo) + bo

    ones = jnp.ones((L, E), jnp.float32)      # PyTorch default LayerNorm init
    zeros = jnp.zeros((L, E), jnp.float32)
    # Packed per-layer vectors: b_sa, ln1w, ln1b, ln2w, ln2b, b2, ln3w, ln3b.
    vecs = jnp.stack([b_sa, ones, zeros, ones, zeros, b2, ones, zeros], axis=1)

    # Final linear lane-padded to 128 columns (zeros in padding lanes).
    lin_w_t = (jnp.zeros((E, out_pad), jnp.float32)
               .at[:, :output_size].set(wlin.T).astype(jnp.bfloat16))
    lin_b = jnp.zeros((1, out_pad), jnp.float32).at[0, :output_size].set(blin)

    return dict(
        w_sa=w_sa.astype(jnp.bfloat16),                        # (L, E, E)
        w1_t=jnp.swapaxes(w1, -1, -2).astype(jnp.bfloat16),    # (L, E, ff)
        w2=w2.astype(jnp.bfloat16),                            # (L, E, ff) lane-dense
        b1=b1.reshape(L, 1, ff),                               # (L, 1, ff) f32
        vecs=vecs,                                             # (L, 8, E)  f32
        lin_w_t=lin_w_t,                                       # (E, 128)   bf16
        lin_b=lin_b)                                           # (1, 128)   f32


def reference_forward(x, params, output_size):
    """Pure-JAX reference of the same math (bf16 operands, f32 accumulation)."""
    def ln(v, w, b):
        mu = v.mean(-1, keepdims=True)
        d = v - mu
        var = (d * d).mean(-1, keepdims=True)
        return d * jax.lax.rsqrt(var + EPS) * w + b

    L = params["w_sa"].shape[0]
    vecs = params["vecs"]
    for l in range(L):
        xb = x.astype(jnp.bfloat16)
        sa = jnp.dot(xb, params["w_sa"][l],
                     preferred_element_type=jnp.float32) + vecs[l, 0:1, :]
        x = ln(x + sa, vecs[l, 1:2, :], vecs[l, 2:3, :])
        x = ln(x, vecs[l, 3:4, :], vecs[l, 4:5, :])
        xb = x.astype(jnp.bfloat16)
        h = jnp.dot(xb, params["w1_t"][l],
                    preferred_element_type=jnp.float32) + params["b1"][l]
        h = jnp.maximum(h, 0.0).astype(jnp.bfloat16)
        ff = jax.lax.dot_general(h, params["w2"][l], (((1,), (1,)), ((), ())),
                                 preferred_element_type=jnp.float32) + vecs[l, 5:6, :]
        x = ln(x + ff, vecs[l, 6:7, :], vecs[l, 7:8, :])
    out = jnp.dot(x.astype(jnp.bfloat16), params["lin_w_t"],
                  preferred_element_type=jnp.float32) + params["lin_b"]
    return out[:, :output_size]


if __name__ == "__main__":
    embed_size, output_size, num_layers, nhead = 32, 4, 2, 4  # nhead: no-op at S==1
    batch = 8

    key = jax.random.PRNGKey(0)
    pkey, xkey = jax.random.split(key)
    params = init_params(pkey, embed_size, output_size, num_layers)
    x = jax.random.normal(xkey, (batch, embed_size), dtype=jnp.float32)

    out = jax.block_until_ready(quantity_decoder_forward(x, params, output_size))
    ref = reference_forward(x, params, output_size)

    assert out.shape == (batch, output_size)
    err = float(jnp.max(jnp.abs(out - ref)))
    assert jnp.allclose(out, ref, atol=2e-3, rtol=2e-3), err
    print("KERNEL_OK")
</pallas_src>

<mosaic_0001>
module attributes {stable_mosaic.version = 11 : i64} {
  func.func @fused_decoder_kernel(%arg0: memref<8x32xf32, #tpu.memory_space<vmem>>, %arg1: memref<2x32x32xbf16, #tpu.memory_space<vmem>>, %arg2: memref<2x32x2048xbf16, #tpu.memory_space<vmem>>, %arg3: memref<2x32x2048xbf16, #tpu.memory_space<vmem>>, %arg4: memref<2x1x2048xf32, #tpu.memory_space<vmem>>, %arg5: memref<2x8x32xf32, #tpu.memory_space<vmem>>, %arg6: memref<32x128xbf16, #tpu.memory_space<vmem>>, %arg7: memref<1x128xf32, #tpu.memory_space<vmem>>, %arg8: memref<8x128xf32, #tpu.memory_space<vmem>>) attributes {dimension_semantics = [], scalar_prefetch = 0 : i64, scratch_operands = 0 : i64, tpu.core_type = #tpu.core_type<tc>} {
    %c0 = arith.constant 0 : index
    %c0_0 = arith.constant 0 : index
    %0 = vector.load %arg0[%c0, %c0_0] : memref<8x32xf32, #tpu.memory_space<vmem>>, vector<8x32xf32>
    %c0_i32 = arith.constant 0 : i32
    %1 = arith.index_cast %c0_i32 : i32 to index
    %c0_1 = arith.constant 0 : index
    %c0_2 = arith.constant 0 : index
    %2 = vector.load %arg5[%1, %c0_1, %c0_2] : memref<2x8x32xf32, #tpu.memory_space<vmem>>, vector<1x8x32xf32>
    %3 = vector.shape_cast %2 : vector<1x8x32xf32> to vector<8x32xf32>
    %4 = arith.truncf %0 : vector<8x32xf32> to vector<8x32xbf16>
    %5 = arith.index_cast %c0_i32 : i32 to index
    %c0_3 = arith.constant 0 : index
    %c0_4 = arith.constant 0 : index
    %6 = vector.load %arg1[%5, %c0_3, %c0_4] : memref<2x32x32xbf16, #tpu.memory_space<vmem>>, vector<1x32x32xbf16>
    %7 = vector.shape_cast %6 : vector<1x32x32xbf16> to vector<32x32xbf16>
    %cst = arith.constant dense<0.000000e+00> : vector<8x32xf32>
    %8 = tpu.matmul %4, %7, %cst {dimension_numbers = #tpu.dot_dimension_numbers<[1], [0], [0], [1], [0, 0, 1, 1], [], []>} : vector<8x32xbf16>, vector<32x32xbf16>, vector<8x32xf32> -> vector<8x32xf32>
    %9 = vector.extract_strided_slice %3 {offsets = [0, 0], sizes = [1, 32], strides = [1, 1]} : vector<8x32xf32> to vector<1x32xf32>
    %10 = vector.broadcast %9 : vector<1x32xf32> to vector<8x32xf32>
    %11 = arith.addf %8, %10 : vector<8x32xf32>
    %12 = arith.addf %0, %11 : vector<8x32xf32>
    %13 = vector.extract_strided_slice %3 {offsets = [1, 0], sizes = [1, 32], strides = [1, 1]} : vector<8x32xf32> to vector<1x32xf32>
    %14 = vector.extract_strided_slice %3 {offsets = [2, 0], sizes = [1, 32], strides = [1, 1]} : vector<8x32xf32> to vector<1x32xf32>
    %cst_5 = arith.constant dense<0.000000e+00> : vector<8xf32>
    %15 = vector.multi_reduction <add>, %12, %cst_5 [1] : vector<8x32xf32> to vector<8xf32>
    %16 = vector.shape_cast %15 : vector<8xf32> to vector<8x1xf32>
    %cst_6 = arith.constant 3.200000e+01 : f32
    %17 = vector.broadcast %cst_6 : f32 to vector<8x1xf32>
    %18 = arith.divf %16, %17 : vector<8x1xf32>
    %19 = vector.broadcast %18 : vector<8x1xf32> to vector<8x32xf32>
    %20 = arith.subf %12, %19 : vector<8x32xf32>
    %21 = arith.mulf %20, %20 : vector<8x32xf32>
    %cst_7 = arith.constant dense<0.000000e+00> : vector<8xf32>
    %22 = vector.multi_reduction <add>, %21, %cst_7 [1] : vector<8x32xf32> to vector<8xf32>
    %23 = vector.shape_cast %22 : vector<8xf32> to vector<8x1xf32>
    %cst_8 = arith.constant 3.200000e+01 : f32
    %24 = vector.broadcast %cst_8 : f32 to vector<8x1xf32>
    %25 = arith.divf %23, %24 : vector<8x1xf32>
    %cst_9 = arith.constant 9.99999974E-6 : f32
    %26 = vector.broadcast %cst_9 : f32 to vector<8x1xf32>
    %27 = arith.addf %25, %26 : vector<8x1xf32>
    %28 = math.rsqrt %27 : vector<8x1xf32>
    %29 = vector.broadcast %28 : vector<8x1xf32> to vector<8x32xf32>
    %30 = arith.mulf %20, %29 : vector<8x32xf32>
    %31 = vector.broadcast %13 : vector<1x32xf32> to vector<8x32xf32>
    %32 = arith.mulf %30, %31 : vector<8x32xf32>
    %33 = vector.broadcast %14 : vector<1x32xf32> to vector<8x32xf32>
    %34 = arith.addf %32, %33 : vector<8x32xf32>
    %35 = vector.extract_strided_slice %3 {offsets = [3, 0], sizes = [1, 32], strides = [1, 1]} : vector<8x32xf32> to vector<1x32xf32>
    %36 = vector.extract_strided_slice %3 {offsets = [4, 0], sizes = [1, 32], strides = [1, 1]} : vector<8x32xf32> to vector<1x32xf32>
    %cst_10 = arith.constant dense<0.000000e+00> : vector<8xf32>
    %37 = vector.multi_reduction <add>, %34, %cst_10 [1] : vector<8x32xf32> to vector<8xf32>
    %38 = vector.shape_cast %37 : vector<8xf32> to vector<8x1xf32>
    %cst_11 = arith.constant 3.200000e+01 : f32
    %39 = vector.broadcast %cst_11 : f32 to vector<8x1xf32>
    %40 = arith.divf %38, %39 : vector<8x1xf32>
    %41 = vector.broadcast %40 : vector<8x1xf32> to vector<8x32xf32>
    %42 = arith.subf %34, %41 : vector<8x32xf32>
    %43 = arith.mulf %42, %42 : vector<8x32xf32>
    %cst_12 = arith.constant dense<0.000000e+00> : vector<8xf32>
    %44 = vector.multi_reduction <add>, %43, %cst_12 [1] : vector<8x32xf32> to vector<8xf32>
    %45 = vector.shape_cast %44 : vector<8xf32> to vector<8x1xf32>
    %cst_13 = arith.constant 3.200000e+01 : f32
    %46 = vector.broadcast %cst_13 : f32 to vector<8x1xf32>
    %47 = arith.divf %45, %46 : vector<8x1xf32>
    %cst_14 = arith.constant 9.99999974E-6 : f32
    %48 = vector.broadcast %cst_14 : f32 to vector<8x1xf32>
    %49 = arith.addf %47, %48 : vector<8x1xf32>
    %50 = math.rsqrt %49 : vector<8x1xf32>
    %51 = vector.broadcast %50 : vector<8x1xf32> to vector<8x32xf32>
    %52 = arith.mulf %42, %51 : vector<8x32xf32>
    %53 = vector.broadcast %35 : vector<1x32xf32> to vector<8x32xf32>
    %54 = arith.mulf %52, %53 : vector<8x32xf32>
    %55 = vector.broadcast %36 : vector<1x32xf32> to vector<8x32xf32>
    %56 = arith.addf %54, %55 : vector<8x32xf32>
    %57 = arith.truncf %56 : vector<8x32xf32> to vector<8x32xbf16>
    %58 = arith.index_cast %c0_i32 : i32 to index
    %c0_15 = arith.constant 0 : index
    %c0_16 = arith.constant 0 : index
    %59 = vector.load %arg2[%58, %c0_15, %c0_16] : memref<2x32x2048xbf16, #tpu.memory_space<vmem>>, vector<1x32x2048xbf16>
    %60 = vector.shape_cast %59 : vector<1x32x2048xbf16> to vector<32x2048xbf16>
    %cst_17 = arith.constant dense<0.000000e+00> : vector<8x2048xf32>
    %61 = tpu.matmul %57, %60, %cst_17 {dimension_numbers = #tpu.dot_dimension_numbers<[1], [0], [0], [1], [0, 0, 1, 1], [], []>} : vector<8x32xbf16>, vector<32x2048xbf16>, vector<8x2048xf32> -> vector<8x2048xf32>
    %62 = arith.index_cast %c0_i32 : i32 to index
    %c0_18 = arith.constant 0 : index
    %c0_19 = arith.constant 0 : index
    %63 = vector.load %arg4[%62, %c0_18, %c0_19] : memref<2x1x2048xf32, #tpu.memory_space<vmem>>, vector<1x1x2048xf32>
    %64 = vector.shape_cast %63 : vector<1x1x2048xf32> to vector<1x2048xf32>
    %65 = vector.broadcast %64 : vector<1x2048xf32> to vector<8x2048xf32>
    %66 = arith.addf %61, %65 : vector<8x2048xf32>
    %cst_20 = arith.constant 0.000000e+00 : f32
    %67 = vector.broadcast %cst_20 : f32 to vector<8x2048xf32>
    %68 = arith.maximumf %66, %67 : vector<8x2048xf32>
    %69 = arith.truncf %68 : vector<8x2048xf32> to vector<8x2048xbf16>
    %70 = arith.index_cast %c0_i32 : i32 to index
    %c0_21 = arith.constant 0 : index
    %c0_22 = arith.constant 0 : index
    %71 = vector.load %arg3[%70, %c0_21, %c0_22] : memref<2x32x2048xbf16, #tpu.memory_space<vmem>>, vector<1x32x2048xbf16>
    %72 = vector.shape_cast %71 : vector<1x32x2048xbf16> to vector<32x2048xbf16>
    %cst_23 = arith.constant dense<0.000000e+00> : vector<8x32xf32>
    %73 = tpu.matmul %69, %72, %cst_23 {dimension_numbers = #tpu.dot_dimension_numbers<[1], [1], [0], [0], [0, 0, 1, 0], [], []>} : vector<8x2048xbf16>, vector<32x2048xbf16>, vector<8x32xf32> -> vector<8x32xf32>
    %74 = vector.extract_strided_slice %3 {offsets = [5, 0], sizes = [1, 32], strides = [1, 1]} : vector<8x32xf32> to vector<1x32xf32>
    %75 = vector.broadcast %74 : vector<1x32xf32> to vector<8x32xf32>
    %76 = arith.addf %73, %75 : vector<8x32xf32>
    %77 = arith.addf %56, %76 : vector<8x32xf32>
    %78 = vector.extract_strided_slice %3 {offsets = [6, 0], sizes = [1, 32], strides = [1, 1]} : vector<8x32xf32> to vector<1x32xf32>
    %79 = vector.extract_strided_slice %3 {offsets = [7, 0], sizes = [1, 32], strides = [1, 1]} : vector<8x32xf32> to vector<1x32xf32>
    %cst_24 = arith.constant dense<0.000000e+00> : vector<8xf32>
    %80 = vector.multi_reduction <add>, %77, %cst_24 [1] : vector<8x32xf32> to vector<8xf32>
    %81 = vector.shape_cast %80 : vector<8xf32> to vector<8x1xf32>
    %cst_25 = arith.constant 3.200000e+01 : f32
    %82 = vector.broadcast %cst_25 : f32 to vector<8x1xf32>
    %83 = arith.divf %81, %82 : vector<8x1xf32>
    %84 = vector.broadcast %83 : vector<8x1xf32> to vector<8x32xf32>
    %85 = arith.subf %77, %84 : vector<8x32xf32>
    %86 = arith.mulf %85, %85 : vector<8x32xf32>
    %cst_26 = arith.constant dense<0.000000e+00> : vector<8xf32>
    %87 = vector.multi_reduction <add>, %86, %cst_26 [1] : vector<8x32xf32> to vector<8xf32>
    %88 = vector.shape_cast %87 : vector<8xf32> to vector<8x1xf32>
    %cst_27 = arith.constant 3.200000e+01 : f32
    %89 = vector.broadcast %cst_27 : f32 to vector<8x1xf32>
    %90 = arith.divf %88, %89 : vector<8x1xf32>
    %cst_28 = arith.constant 9.99999974E-6 : f32
    %91 = vector.broadcast %cst_28 : f32 to vector<8x1xf32>
    %92 = arith.addf %90, %91 : vector<8x1xf32>
    %93 = math.rsqrt %92 : vector<8x1xf32>
    %94 = vector.broadcast %93 : vector<8x1xf32> to vector<8x32xf32>
    %95 = arith.mulf %85, %94 : vector<8x32xf32>
    %96 = vector.broadcast %78 : vector<1x32xf32> to vector<8x32xf32>
    %97 = arith.mulf %95, %96 : vector<8x32xf32>
    %98 = vector.broadcast %79 : vector<1x32xf32> to vector<8x32xf32>
    %99 = arith.addf %97, %98 : vector<8x32xf32>
    %c1_i32 = arith.constant 1 : i32
    %100 = arith.index_cast %c1_i32 : i32 to index
    %c0_29 = arith.constant 0 : index
    %c0_30 = arith.constant 0 : index
    %101 = vector.load %arg5[%100, %c0_29, %c0_30] : memref<2x8x32xf32, #tpu.memory_space<vmem>>, vector<1x8x32xf32>
    %102 = vector.shape_cast %101 : vector<1x8x32xf32> to vector<8x32xf32>
    %103 = arith.truncf %99 : vector<8x32xf32> to vector<8x32xbf16>
    %104 = arith.index_cast %c1_i32 : i32 to index
    %c0_31 = arith.constant 0 : index
    %c0_32 = arith.constant 0 : index
    %105 = vector.load %arg1[%104, %c0_31, %c0_32] : memref<2x32x32xbf16, #tpu.memory_space<vmem>>, vector<1x32x32xbf16>
    %106 = vector.shape_cast %105 : vector<1x32x32xbf16> to vector<32x32xbf16>
    %cst_33 = arith.constant dense<0.000000e+00> : vector<8x32xf32>
    %107 = tpu.matmul %103, %106, %cst_33 {dimension_numbers = #tpu.dot_dimension_numbers<[1], [0], [0], [1], [0, 0, 1, 1], [], []>} : vector<8x32xbf16>, vector<32x32xbf16>, vector<8x32xf32> -> vector<8x32xf32>
    %108 = vector.extract_strided_slice %102 {offsets = [0, 0], sizes = [1, 32], strides = [1, 1]} : vector<8x32xf32> to vector<1x32xf32>
    %109 = vector.broadcast %108 : vector<1x32xf32> to vector<8x32xf32>
    %110 = arith.addf %107, %109 : vector<8x32xf32>
    %111 = arith.addf %99, %110 : vector<8x32xf32>
    %112 = vector.extract_strided_slice %102 {offsets = [1, 0], sizes = [1, 32], strides = [1, 1]} : vector<8x32xf32> to vector<1x32xf32>
    %113 = vector.extract_strided_slice %102 {offsets = [2, 0], sizes = [1, 32], strides = [1, 1]} : vector<8x32xf32> to vector<1x32xf32>
    %cst_34 = arith.constant dense<0.000000e+00> : vector<8xf32>
    %114 = vector.multi_reduction <add>, %111, %cst_34 [1] : vector<8x32xf32> to vector<8xf32>
    %115 = vector.shape_cast %114 : vector<8xf32> to vector<8x1xf32>
    %cst_35 = arith.constant 3.200000e+01 : f32
    %116 = vector.broadcast %cst_35 : f32 to vector<8x1xf32>
    %117 = arith.divf %115, %116 : vector<8x1xf32>
    %118 = vector.broadcast %117 : vector<8x1xf32> to vector<8x32xf32>
    %119 = arith.subf %111, %118 : vector<8x32xf32>
    %120 = arith.mulf %119, %119 : vector<8x32xf32>
    %cst_36 = arith.constant dense<0.000000e+00> : vector<8xf32>
    %121 = vector.multi_reduction <add>, %120, %cst_36 [1] : vector<8x32xf32> to vector<8xf32>
    %122 = vector.shape_cast %121 : vector<8xf32> to vector<8x1xf32>
    %cst_37 = arith.constant 3.200000e+01 : f32
    %123 = vector.broadcast %cst_37 : f32 to vector<8x1xf32>
    %124 = arith.divf %122, %123 : vector<8x1xf32>
    %cst_38 = arith.constant 9.99999974E-6 : f32
    %125 = vector.broadcast %cst_38 : f32 to vector<8x1xf32>
    %126 = arith.addf %124, %125 : vector<8x1xf32>
    %127 = math.rsqrt %126 : vector<8x1xf32>
    %128 = vector.broadcast %127 : vector<8x1xf32> to vector<8x32xf32>
    %129 = arith.mulf %119, %128 : vector<8x32xf32>
    %130 = vector.broadcast %112 : vector<1x32xf32> to vector<8x32xf32>
    %131 = arith.mulf %129, %130 : vector<8x32xf32>
    %132 = vector.broadcast %113 : vector<1x32xf32> to vector<8x32xf32>
    %133 = arith.addf %131, %132 : vector<8x32xf32>
    %134 = vector.extract_strided_slice %102 {offsets = [3, 0], sizes = [1, 32], strides = [1, 1]} : vector<8x32xf32> to vector<1x32xf32>
    %135 = vector.extract_strided_slice %102 {offsets = [4, 0], sizes = [1, 32], strides = [1, 1]} : vector<8x32xf32> to vector<1x32xf32>
    %cst_39 = arith.constant dense<0.000000e+00> : vector<8xf32>
    %136 = vector.multi_reduction <add>, %133, %cst_39 [1] : vector<8x32xf32> to vector<8xf32>
    %137 = vector.shape_cast %136 : vector<8xf32> to vector<8x1xf32>
    %cst_40 = arith.constant 3.200000e+01 : f32
    %138 = vector.broadcast %cst_40 : f32 to vector<8x1xf32>
    %139 = arith.divf %137, %138 : vector<8x1xf32>
    %140 = vector.broadcast %139 : vector<8x1xf32> to vector<8x32xf32>
    %141 = arith.subf %133, %140 : vector<8x32xf32>
    %142 = arith.mulf %141, %141 : vector<8x32xf32>
    %cst_41 = arith.constant dense<0.000000e+00> : vector<8xf32>
    %143 = vector.multi_reduction <add>, %142, %cst_41 [1] : vector<8x32xf32> to vector<8xf32>
    %144 = vector.shape_cast %143 : vector<8xf32> to vector<8x1xf32>
    %cst_42 = arith.constant 3.200000e+01 : f32
    %145 = vector.broadcast %cst_42 : f32 to vector<8x1xf32>
    %146 = arith.divf %144, %145 : vector<8x1xf32>
    %cst_43 = arith.constant 9.99999974E-6 : f32
    %147 = vector.broadcast %cst_43 : f32 to vector<8x1xf32>
    %148 = arith.addf %146, %147 : vector<8x1xf32>
    %149 = math.rsqrt %148 : vector<8x1xf32>
    %150 = vector.broadcast %149 : vector<8x1xf32> to vector<8x32xf32>
    %151 = arith.mulf %141, %150 : vector<8x32xf32>
    %152 = vector.broadcast %134 : vector<1x32xf32> to vector<8x32xf32>
    %153 = arith.mulf %151, %152 : vector<8x32xf32>
    %154 = vector.broadcast %135 : vector<1x32xf32> to vector<8x32xf32>
    %155 = arith.addf %153, %154 : vector<8x32xf32>
    %156 = arith.truncf %155 : vector<8x32xf32> to vector<8x32xbf16>
    %157 = arith.index_cast %c1_i32 : i32 to index
    %c0_44 = arith.constant 0 : index
    %c0_45 = arith.constant 0 : index
    %158 = vector.load %arg2[%157, %c0_44, %c0_45] : memref<2x32x2048xbf16, #tpu.memory_space<vmem>>, vector<1x32x2048xbf16>
    %159 = vector.shape_cast %158 : vector<1x32x2048xbf16> to vector<32x2048xbf16>
    %cst_46 = arith.constant dense<0.000000e+00> : vector<8x2048xf32>
    %160 = tpu.matmul %156, %159, %cst_46 {dimension_numbers = #tpu.dot_dimension_numbers<[1], [0], [0], [1], [0, 0, 1, 1], [], []>} : vector<8x32xbf16>, vector<32x2048xbf16>, vector<8x2048xf32> -> vector<8x2048xf32>
    %161 = arith.index_cast %c1_i32 : i32 to index
    %c0_47 = arith.constant 0 : index
    %c0_48 = arith.constant 0 : index
    %162 = vector.load %arg4[%161, %c0_47, %c0_48] : memref<2x1x2048xf32, #tpu.memory_space<vmem>>, vector<1x1x2048xf32>
    %163 = vector.shape_cast %162 : vector<1x1x2048xf32> to vector<1x2048xf32>
    %164 = vector.broadcast %163 : vector<1x2048xf32> to vector<8x2048xf32>
    %165 = arith.addf %160, %164 : vector<8x2048xf32>
    %cst_49 = arith.constant 0.000000e+00 : f32
    %166 = vector.broadcast %cst_49 : f32 to vector<8x2048xf32>
    %167 = arith.maximumf %165, %166 : vector<8x2048xf32>
    %168 = arith.truncf %167 : vector<8x2048xf32> to vector<8x2048xbf16>
    %169 = arith.index_cast %c1_i32 : i32 to index
    %c0_50 = arith.constant 0 : index
    %c0_51 = arith.constant 0 : index
    %170 = vector.load %arg3[%169, %c0_50, %c0_51] : memref<2x32x2048xbf16, #tpu.memory_space<vmem>>, vector<1x32x2048xbf16>
    %171 = vector.shape_cast %170 : vector<1x32x2048xbf16> to vector<32x2048xbf16>
    %cst_52 = arith.constant dense<0.000000e+00> : vector<8x32xf32>
    %172 = tpu.matmul %168, %171, %cst_52 {dimension_numbers = #tpu.dot_dimension_numbers<[1], [1], [0], [0], [0, 0, 1, 0], [], []>} : vector<8x2048xbf16>, vector<32x2048xbf16>, vector<8x32xf32> -> vector<8x32xf32>
    %173 = vector.extract_strided_slice %102 {offsets = [5, 0], sizes = [1, 32], strides = [1, 1]} : vector<8x32xf32> to vector<1x32xf32>
    %174 = vector.broadcast %173 : vector<1x32xf32> to vector<8x32xf32>
    %175 = arith.addf %172, %174 : vector<8x32xf32>
    %176 = arith.addf %155, %175 : vector<8x32xf32>
    %177 = vector.extract_strided_slice %102 {offsets = [6, 0], sizes = [1, 32], strides = [1, 1]} : vector<8x32xf32> to vector<1x32xf32>
    %178 = vector.extract_strided_slice %102 {offsets = [7, 0], sizes = [1, 32], strides = [1, 1]} : vector<8x32xf32> to vector<1x32xf32>
    %cst_53 = arith.constant dense<0.000000e+00> : vector<8xf32>
    %179 = vector.multi_reduction <add>, %176, %cst_53 [1] : vector<8x32xf32> to vector<8xf32>
    %180 = vector.shape_cast %179 : vector<8xf32> to vector<8x1xf32>
    %cst_54 = arith.constant 3.200000e+01 : f32
    %181 = vector.broadcast %cst_54 : f32 to vector<8x1xf32>
    %182 = arith.divf %180, %181 : vector<8x1xf32>
    %183 = vector.broadcast %182 : vector<8x1xf32> to vector<8x32xf32>
    %184 = arith.subf %176, %183 : vector<8x32xf32>
    %185 = arith.mulf %184, %184 : vector<8x32xf32>
    %cst_55 = arith.constant dense<0.000000e+00> : vector<8xf32>
    %186 = vector.multi_reduction <add>, %185, %cst_55 [1] : vector<8x32xf32> to vector<8xf32>
    %187 = vector.shape_cast %186 : vector<8xf32> to vector<8x1xf32>
    %cst_56 = arith.constant 3.200000e+01 : f32
    %188 = vector.broadcast %cst_56 : f32 to vector<8x1xf32>
    %189 = arith.divf %187, %188 : vector<8x1xf32>
    %cst_57 = arith.constant 9.99999974E-6 : f32
    %190 = vector.broadcast %cst_57 : f32 to vector<8x1xf32>
    %191 = arith.addf %189, %190 : vector<8x1xf32>
    %192 = math.rsqrt %191 : vector<8x1xf32>
    %193 = vector.broadcast %192 : vector<8x1xf32> to vector<8x32xf32>
    %194 = arith.mulf %184, %193 : vector<8x32xf32>
    %195 = vector.broadcast %177 : vector<1x32xf32> to vector<8x32xf32>
    %196 = arith.mulf %194, %195 : vector<8x32xf32>
    %197 = vector.broadcast %178 : vector<1x32xf32> to vector<8x32xf32>
    %198 = arith.addf %196, %197 : vector<8x32xf32>
    %c2_i32 = arith.constant 2 : i32
    %199 = arith.truncf %198 : vector<8x32xf32> to vector<8x32xbf16>
    %c0_58 = arith.constant 0 : index
    %c0_59 = arith.constant 0 : index
    %200 = vector.load %arg6[%c0_58, %c0_59] : memref<32x128xbf16, #tpu.memory_space<vmem>>, vector<32x128xbf16>
    %cst_60 = arith.constant dense<0.000000e+00> : vector<8x128xf32>
    %201 = tpu.matmul %199, %200, %cst_60 {dimension_numbers = #tpu.dot_dimension_numbers<[1], [0], [0], [1], [0, 0, 1, 1], [], []>} : vector<8x32xbf16>, vector<32x128xbf16>, vector<8x128xf32> -> vector<8x128xf32>
    %c0_61 = arith.constant 0 : index
    %c0_62 = arith.constant 0 : index
    %202 = vector.load %arg7[%c0_61, %c0_62] : memref<1x128xf32, #tpu.memory_space<vmem>>, vector<1x128xf32>
    %203 = vector.broadcast %202 : vector<1x128xf32> to vector<8x128xf32>
    %204 = arith.addf %201, %203 : vector<8x128xf32>
    %c0_63 = arith.constant 0 : index
    %c0_64 = arith.constant 0 : index
    %205 = vector.load %arg8[%c0_63, %c0_64] : memref<8x128xf32, #tpu.memory_space<vmem>>, vector<8x128xf32>
    tpu.vector_store %arg8[%c0_63, %c0_64], %204 {strides = array<i32>} : memref<8x128xf32, #tpu.memory_space<vmem>>, vector<8x128xf32>,
    return
  }
}

</mosaic_0001>

<llo_original>
// kernel: quantity_decoder_forward.1
$region0: #{quantity_decoder_forward.1}
  #allocation0 [shape = 'u32[]', space=smem, size = 0x4, offset = 0x4, fixed_abs, tag = 'smem constant byte address 0x4 - core index']
  #allocation1 [shape = 'u32[72,128]{1,0:T(1,128)}', space=vmem, size = 0x9000, scoped, tag = 'internal scratch']
  %s0 = inlined_call_operand.hbm [shape: f32[8,32], index: 0, kind: input, shape index: {}]
  %s1 = inlined_call_operand.hbm [shape: bf16[2,32,32], index: 1, kind: input, shape index: {}]
  %s2 = inlined_call_operand.hbm [shape: bf16[2,32,2048], index: 2, kind: input, shape index: {}]
  %s3 = inlined_call_operand.hbm [shape: bf16[2,32,2048], index: 3, kind: input, shape index: {}]
  %s4 = inlined_call_operand.hbm [shape: f32[2,1,2048], index: 4, kind: input, shape index: {}]
  %s5 = inlined_call_operand.hbm [shape: f32[2,8,32], index: 5, kind: input, shape index: {}]
  %s6 = inlined_call_operand.hbm [shape: bf16[32,128], index: 6, kind: input, shape index: {}]
  %s7 = inlined_call_operand.vmem [shape: f32[1,128], index: 7, kind: input, shape index: {}]
  %s8 = inlined_call_operand.vmem [shape: f32[8,128], index: 8, kind: output, shape index: {}]
  %s9 = sld [smem:[#allocation0]]
  $region70: #{quantity_decoder_forward.1} parent=0
    _
  %s11 = ssub.s32 1, %s9
  %s12 = scalar_select 0, %s11, %s9
  $region1: #{quantity_decoder_forward.1} parent=0
    #allocation2 [shape = 'u8[4096]{0}', space=vmem, size = 0x1000, scoped, tag = 'input window, operand 0, single buffered']
    #allocation3 [shape = 's32[1]{0}', space=sflag, size = 0x4, scoped, tag = 'scoped memory for quantity_decoder_forward.1']
    #allocation4 [shape = 'u8[16384]{0}', space=vmem, size = 0x4000, scoped, tag = 'input window, operand 1, single buffered']
    #allocation5 [shape = 's32[1]{0}', space=sflag, size = 0x4, scoped, tag = 'scoped memory for quantity_decoder_forward.1']
    #allocation6 [shape = 'u8[262144]{0}', space=vmem, size = 0x40000, scoped, tag = 'input window, operand 2, single buffered']
    #allocation7 [shape = 'u8[262144]{0}', space=vmem, size = 0x40000, scoped, tag = 'input window, operand 3, single buffered']
    #allocation8 [shape = 's32[1]{0}', space=sflag, size = 0x4, scoped, tag = 'scoped memory for quantity_decoder_forward.1']
    #allocation9 [shape = 'u8[16384]{0}', space=vmem, size = 0x4000, scoped, tag = 'input window, operand 4, single buffered']
    #allocation10 [shape = 'u8[8192]{0}', space=vmem, size = 0x2000, scoped, tag = 'input window, operand 5, single buffered']
    #allocation11 [shape = 's32[1]{0}', space=sflag, size = 0x4, scoped, tag = 'scoped memory for quantity_decoder_forward.1']
    #allocation12 [shape = 'u8[8192]{0}', space=vmem, size = 0x2000, scoped, tag = 'input window, operand 6, single buffered']
    %13 = vsyncpa [#allocation3], 0
    %14 = vsyncpa [#allocation5], 0
    %15 = vsyncpa [#allocation8], 0
    %16 = vsyncpa [#allocation11], 0
    // Predicated region
    $region2: #{quantity_decoder_forward.1} parent=1 // pred_check
      _
    $region3: #{quantity_decoder_forward.1} parent=1 // pred_check_branch
      %18 = sbr.rel (0) target = $region5
    $region4: #{quantity_decoder_forward.1} parent=1 // pred_region
      %20 = vsyncadd [#allocation3], 0
      %s22 = sshll.u32 %s0, 4
      %s23 = int_to_ptr.hbm [resolvable:$true] %s22
      %s24 = sshll.u32 [#allocation2], 4
      %s25 = int_to_ptr.vmem [resolvable:$true] %s24
      %27 = dma.hbm_to_vmem [thread:$0]  %s23, 128, %s25, [#allocation3]
    $region5: #{quantity_decoder_forward.1} parent=1 // pred_fallthru
      _
    // Predicated region
    $region6: #{quantity_decoder_forward.1} parent=1 // pred_check
      _
    $region7: #{quantity_decoder_forward.1} parent=1 // pred_check_branch
      %29 = sbr.rel (0) target = $region9
    $region8: #{quantity_decoder_forward.1} parent=1 // pred_region
      %31 = vsyncadd [#allocation5], 0
      %s32 = sshll.u32 %s1, 4
      %s33 = int_to_ptr.hbm [resolvable:$true] %s32
      %s34 = sshll.u32 [#allocation4], 4
      %s35 = int_to_ptr.vmem [resolvable:$true] %s34
      %40 = dma.hbm_to_vmem [thread:$0]  %s33, 512, %s35, [#allocation5], 64, 64, 4
    $region9: #{quantity_decoder_forward.1} parent=1 // pred_fallthru
      _
    // Predicated region
    $region10: #{quantity_decoder_forward.1} parent=1 // pred_check
      _
    $region11: #{quantity_decoder_forward.1} parent=1 // pred_check_branch
      %42 = sbr.rel (0) target = $region13
    $region12: #{quantity_decoder_forward.1} parent=1 // pred_region
      %44 = vsyncadd [#allocation5], 0
      %s45 = sshll.u32 %s2, 4
      %s46 = int_to_ptr.hbm [resolvable:$true] %s45
      %s47 = sshll.u32 [#allocation6], 4
      %s48 = int_to_ptr.vmem [resolvable:$true] %s47
      %53 = dma.hbm_to_vmem [thread:$0]  %s46, 8192, %s48, [#allocation5], 1024, 1024, 64
    $region13: #{quantity_decoder_forward.1} parent=1 // pred_fallthru
      _
    // Predicated region
    $region14: #{quantity_decoder_forward.1} parent=1 // pred_check
      _
    $region15: #{quantity_decoder_forward.1} parent=1 // pred_check_branch
      %55 = sbr.rel (0) target = $region17
    $region16: #{quantity_decoder_forward.1} parent=1 // pred_region
      %57 = vsyncadd [#allocation8], 0
      %s58 = sshll.u32 %s3, 4
      %s59 = int_to_ptr.hbm [resolvable:$true] %s58
      %s60 = sshll.u32 [#allocation7], 4
      %s61 = int_to_ptr.vmem [resolvable:$true] %s60
      %66 = dma.hbm_to_vmem [thread:$0]  %s59, 8192, %s61, [#allocation8], 1024, 1024, 64
    $region17: #{quantity_decoder_forward.1} parent=1 // pred_fallthru
      _
    // Predicated region
    $region18: #{quantity_decoder_forward.1} parent=1 // pred_check
      _
    $region19: #{quantity_decoder_forward.1} parent=1 // pred_check_branch
      %68 = sbr.rel (0) target = $region21
    $region20: #{quantity_decoder_forward.1} parent=1 // pred_region
      %70 = vsyncadd [#allocation8], 0
      %s71 = sshll.u32 %s4, 4
      %s72 = int_to_ptr.hbm [resolvable:$true] %s71
      %s73 = sshll.u32 [#allocation9], 4
      %s74 = int_to_ptr.vmem [resolvable:$true] %s73
      %79 = dma.hbm_to_vmem [thread:$0]  %s72, 512, %s74, [#allocation8], 256, 256, 16
    $region21: #{quantity_decoder_forward.1} parent=1 // pred_fallthru
      _
    // Predicated region
    $region22: #{quantity_decoder_forward.1} parent=1 // pred_check
      _
    $region23: #{quantity_decoder_forward.1} parent=1 // pred_check_branch
      %81 = sbr.rel (0) target = $region25
    $region24: #{quantity_decoder_forward.1} parent=1 // pred_region
      %83 = vsyncadd [#allocation11], 0
      %s84 = sshll.u32 %s5, 4
      %s85 = int_to_ptr.hbm [resolvable:$true] %s84
      %s86 = sshll.u32 [#allocation10], 4
      %s87 = int_to_ptr.vmem [resolvable:$true] %s86
      %92 = dma.hbm_to_vmem [thread:$0]  %s85, 256, %s87, [#allocation11], 128, 128, 8
    $region25: #{quantity_decoder_forward.1} parent=1 // pred_fallthru
      _
    // Predicated region
    $region26: #{quantity_decoder_forward.1} parent=1 // pred_check
      _
    $region27: #{quantity_decoder_forward.1} parent=1 // pred_check_branch
      %94 = sbr.rel (0) target = $region29
    $region28: #{quantity_decoder_forward.1} parent=1 // pred_region
      %96 = vsyncadd [#allocation11], 0
      %s97 = sshll.u32 %s6, 4
      %s98 = int_to_ptr.hbm [resolvable:$true] %s97
      %s99 = sshll.u32 [#allocation12], 4
      %s100 = int_to_ptr.vmem [resolvable:$true] %s99
      %105 = dma.hbm_to_vmem [thread:$0]  %s98, 256, %s100, [#allocation11], 64, 64, 4
    $region29: #{quantity_decoder_forward.1} parent=1 // pred_fallthru
      _
    // Predicated region
    $region30: #{quantity_decoder_forward.1} parent=1 // pred_check
      _
    $region31: #{quantity_decoder_forward.1} parent=1 // pred_check_branch
      %107 = sbr.rel (0) target = $region33
    $region32: #{quantity_decoder_forward.1} parent=1 // pred_region
      _
    $region33: #{quantity_decoder_forward.1} parent=1 // pred_fallthru
      _
    // Predicated region
    $region34: #{quantity_decoder_forward.1} parent=1 // pred_check
      _
    $region35: #{quantity_decoder_forward.1} parent=1 // pred_check_branch
      %109 = sbr.rel (0) target = $region37
    $region36: #{quantity_decoder_forward.1} parent=1 // pred_region
      %111 = dma.done [#allocation3], 128
    $region37: #{quantity_decoder_forward.1} parent=1 // pred_fallthru
      _
    // Predicated region
    $region38: #{quantity_decoder_forward.1} parent=1 // pred_check
      _
    $region39: #{quantity_decoder_forward.1} parent=1 // pred_check_branch
      %113 = sbr.rel (0) target = $region41
    $region40: #{quantity_decoder_forward.1} parent=1 // pred_region
      %115 = dma.done [#allocation5], 512
    $region41: #{quantity_decoder_forward.1} parent=1 // pred_fallthru
      _
    // Predicated region
    $region42: #{quantity_decoder_forward.1} parent=1 // pred_check
      _
    $region43: #{quantity_decoder_forward.1} parent=1 // pred_check_branch
      %117 = sbr.rel (0) target = $region45
    $region44: #{quantity_decoder_forward.1} parent=1 // pred_region
      %119 = dma.done [#allocation5], 8192
    $region45: #{quantity_decoder_forward.1} parent=1 // pred_fallthru
      _
    // Predicated region
    $region46: #{quantity_decoder_forward.1} parent=1 // pred_check
      _
    $region47: #{quantity_decoder_forward.1} parent=1 // pred_check_branch
      %121 = sbr.rel (0) target = $region49
    $region48: #{quantity_decoder_forward.1} parent=1 // pred_region
      %123 = dma.done [#allocation8], 8192
    $region49: #{quantity_decoder_forward.1} parent=1 // pred_fallthru
      _
    // Predicated region
    $region50: #{quantity_decoder_forward.1} parent=1 // pred_check
      _
    $region51: #{quantity_decoder_forward.1} parent=1 // pred_check_branch
      %125 = sbr.rel (0) target = $region53
    $region52: #{quantity_decoder_forward.1} parent=1 // pred_region
      %127 = dma.done [#allocation8], 512
    $region53: #{quantity_decoder_forward.1} parent=1 // pred_fallthru
      _
    // Predicated region
    $region54: #{quantity_decoder_forward.1} parent=1 // pred_check
      _
    $region55: #{quantity_decoder_forward.1} parent=1 // pred_check_branch
      %129 = sbr.rel (0) target = $region57
    $region56: #{quantity_decoder_forward.1} parent=1 // pred_region
      %131 = dma.done [#allocation11], 256
    $region57: #{quantity_decoder_forward.1} parent=1 // pred_fallthru
      _
    // Predicated region
    $region58: #{quantity_decoder_forward.1} parent=1 // pred_check
      _
    $region59: #{quantity_decoder_forward.1} parent=1 // pred_check_branch
      %133 = sbr.rel (0) target = $region61
    $region60: #{quantity_decoder_forward.1} parent=1 // pred_region
      %135 = dma.done [#allocation11], 256
    $region61: #{quantity_decoder_forward.1} parent=1 // pred_fallthru
      _
    %v137 = vld [vmem:[#allocation2] sm:$0xff]
    %v138 = vld [vmem:[#allocation10] sm:$0xff]
    %v139 = vpack.c.bf16 %v137, %v137
    %v140 = vld [vmem:[#allocation4] sm:$0xf]
    %v141 = vld [vmem:[#allocation4 + $0x4] sm:$0xf]
    %v142 = vld [vmem:[#allocation4 + $0x8] sm:$0xf]
    %v143 = vld [vmem:[#allocation4 + $0xc] sm:$0xf]
    %v144 = vperm.slane %v138, 0
    %v149 = vunpack.c.l.b16 %v140
    %v150 = vunpack.c.l.b16 %v141
    %v151 = vunpack.c.l.b16 %v142
    %v152 = vunpack.c.l.b16 %v143
    %v153 = vpack.c.b16 %v150, %v149
    %v154 = vpack.c.b16 %v152, %v151
    %vm157 = vcmask 261120
    %v159 = vsel %vm157, %v139, 0
    %161 = vmatpush.bf16.msra.mxu0 0
    %162 = vmatpush.bf16.msra.mxu0 0
    %163 = vmatpush.bf16.msra.mxu0 0
    %164 = vmatpush.bf16.msra.mxu0 0
    %165 = vmatpush.bf16.msra.mxu0 0
    %166 = vmatpush.bf16.msra.mxu0 0
    %167 = vmatpush.bf16.msra.mxu0 %v154
    %168 = vmatpush.bf16.msra.mxu0 %v153
    %169 = vmatmul.bf16.gmra.mxu0 %v159
    %v170 = vpop.f32.mrf.mxu0
    %v171 = vadd.f32 %v144, %v170
    %v172 = vpop.f32.mrf.mxu0
    %173 = vdwg.mxu0
    %v174 = vadd.f32 %v137, %v171
    %v175 = vsel %vm157, %v174, 0.0
    %176 = vadd.xlane.f32.xlu0 %v175
    %v177 = vpop.xlane.xlu0 %176
    %v178 = vrcp.pop 32.0
    %v179 = vmul.f32 32.0, %v178
    %v180 = vsub.f32 1.0, %v179
    %v181 = vmul.f32 %v178, %v180
    %v182 = vadd.f32 %v178, %v181
    %vm183 = vweird.f32 %v178
    %v184 = vsel %vm183, %v178, %v182
    %v185 = vmul.f32 %v177, %v184
    %v186 = vsub.f32 %v174, %v185
    %v187 = vmul.f32 %v186, %v186
    %v188 = vsel %vm157, %v187, 0.0
    %189 = vadd.xlane.f32.xlu0 %v188
    %v190 = vpop.xlane.xlu0 %189
    %v191 = vmul.f32 %v190, %v184
    %v192 = vadd.f32 %v191, 1e-05
    %v193 = vrsqrt.pop %v192
    %v194 = vmul.f32 %v193, %v192
    %v195 = vmul.f32 %v194, %v193
    %v196 = vmul.f32 0.5, %v195
    %v197 = vsub.f32 1.5, %v196
    %v198 = vmul.f32 %v193, %v197
    %vm199 = vweird.f32 %v192
    %vm200 = vweird.f32 %v193
    %vm201 = vmor %vm199, %vm200
    %v202 = vsel %vm201, %v193, %v198
    %v203 = vmul.f32 %v186, %v202
    %v204 = vperm.slane %v138, 1
    %v205 = vmul.f32 %v203, %v204
    %v206 = vperm.slane %v138, 2
    %v207 = vadd.f32 %v205, %v206
    %v208 = vsel %vm157, %v207, 0.0
    %209 = vadd.xlane.f32.xlu0 %v208
    %v210 = vpop.xlane.xlu0 %209
    %v211 = vmul.f32 %v210, %v184
    %v212 = vsub.f32 %v207, %v211
    %v213 = vmul.f32 %v212, %v212
    %v214 = vsel %vm157, %v213, 0.0
    %215 = vadd.xlane.f32.xlu0 %v214
    %v216 = vpop.xlane.xlu0 %215
    %v217 = vmul.f32 %v216, %v184
    %v218 = vadd.f32 %v217, 1e-05
    %v219 = vrsqrt.pop %v218
    %v220 = vmul.f32 %v219, %v218
    %v221 = vmul.f32 %v220, %v219
    %v222 = vmul.f32 0.5, %v221
    %v223 = vsub.f32 1.5, %v222
    %v224 = vmul.f32 %v219, %v223
    %vm225 = vweird.f32 %v218
    %vm226 = vweird.f32 %v219
    %vm227 = vmor %vm225, %vm226
    %v228 = vsel %vm227, %v219, %v224
    %v229 = vmul.f32 %v212, %v228
    %v230 = vperm.slane %v138, 3
    %v231 = vmul.f32 %v229, %v230
    %v232 = vperm.slane %v138, 4
    %v233 = vadd.f32 %v231, %v232
    %v234 = vpack.c.bf16 %v233, %v233
    %v235 = vld [vmem:[#allocation6] sm:$0xff]
    %v236 = vld [vmem:[#allocation6 + $0x8] sm:$0xff]
    %v237 = vld [vmem:[#allocation6 + $0x10] sm:$0xff]
    %v238 = vld [vmem:[#allocation6 + $0x18] sm:$0xff]
    %v239 = vld [vmem:[#allocation6 + $0x20] sm:$0xff]
    %v240 = vld [vmem:[#allocation6 + $0x28] sm:$0xff]
    %v241 = vld [vmem:[#allocation6 + $0x30] sm:$0xff]
    %v242 = vld [vmem:[#allocation6 + $0x38] sm:$0xff]
    %v243 = vld [vmem:[#allocation6 + $0x40] sm:$0xff]
    %v244 = vld [vmem:[#allocation6 + $0x48] sm:$0xff]
    %v245 = vld [vmem:[#allocation6 + $0x50] sm:$0xff]
    %v246 = vld [vmem:[#allocation6 + $0x58] sm:$0xff]
    %v247 = vld [vmem:[#allocation6 + $0x60] sm:$0xff]
    %v248 = vld [vmem:[#allocation6 + $0x68] sm:$0xff]
    %v249 = vld [vmem:[#allocation6 + $0x70] sm:$0xff]
    %v250 = vld [vmem:[#allocation6 + $0x78] sm:$0xff]
    %v251 = vld [vmem:[#allocation6 + $0x80] sm:$0xff]
    %v252 = vld [vmem:[#allocation6 + $0x88] sm:$0xff]
    %v253 = vld [vmem:[#allocation6 + $0x90] sm:$0xff]
    %v254 = vld [vmem:[#allocation6 + $0x98] sm:$0xff]
    %v255 = vld [vmem:[#allocation6 + $0xa0] sm:$0xff]
    %v256 = vld [vmem:[#allocation6 + $0xa8] sm:$0xff]
    %v257 = vld [vmem:[#allocation6 + $0xb0] sm:$0xff]
    %v258 = vld [vmem:[#allocation6 + $0xb8] sm:$0xff]
    %v259 = vld [vmem:[#allocation6 + $0xc0] sm:$0xff]
    %v260 = vld [vmem:[#allocation6 + $0xc8] sm:$0xff]
    %v261 = vld [vmem:[#allocation6 + $0xd0] sm:$0xff]
    %v262 = vld [vmem:[#allocation6 + $0xd8] sm:$0xff]
    %v263 = vld [vmem:[#allocation6 + $0xe0] sm:$0xff]
    %v264 = vld [vmem:[#allocation6 + $0xe8] sm:$0xff]
    %v265 = vld [vmem:[#allocation6 + $0xf0] sm:$0xff]
    %v266 = vld [vmem:[#allocation6 + $0xf8] sm:$0xff]
    %v267 = vld [vmem:[#allocation9] sm:$0xff]
    %v268 = vld [vmem:[#allocation9 + $0x8] sm:$0xff]
    %v271 = vperm.slane %v267, 0
    %v272 = vperm.slane %v267, 1
    %v273 = vperm.slane %v267, 2
    %v274 = vperm.slane %v267, 3
    %v275 = vperm.slane %v267, 4
    %v276 = vperm.slane %v267, 5
    %v277 = vperm.slane %v267, 6
    %v278 = vperm.slane %v267, 7
    %v279 = vperm.slane %v268, 0
    %v280 = vperm.slane %v268, 1
    %v281 = vperm.slane %v268, 2
    %v282 = vperm.slane %v268, 3
    %v283 = vperm.slane %v268, 4
    %v284 = vperm.slane %v268, 5
    %v285 = vperm.slane %v268, 6
    %v286 = vperm.slane %v268, 7
    %v335 = vunpack.c.l.b16 %v235
    %v336 = vunpack.c.h.b16 %v235
    %v337 = vunpack.c.l.b16 %v236
    %v338 = vunpack.c.h.b16 %v236
    %v339 = vunpack.c.l.b16 %v237
    %v340 = vunpack.c.h.b16 %v237
    %v341 = vunpack.c.l.b16 %v238
    %v342 = vunpack.c.h.b16 %v238
    %v343 = vunpack.c.l.b16 %v239
    %v344 = vunpack.c.h.b16 %v239
    %v345 = vunpack.c.l.b16 %v240
    %v346 = vunpack.c.h.b16 %v240
    %v347 = vunpack.c.l.b16 %v241
    %v348 = vunpack.c.h.b16 %v241
    %v349 = vunpack.c.l.b16 %v242
    %v350 = vunpack.c.h.b16 %v242
    %v351 = vunpack.c.l.b16 %v243
    %v352 = vunpack.c.h.b16 %v243
    %v353 = vunpack.c.l.b16 %v244
    %v354 = vunpack.c.h.b16 %v244
    %v355 = vunpack.c.l.b16 %v245
    %v356 = vunpack.c.h.b16 %v245
    %v357 = vunpack.c.l.b16 %v246
    %v358 = vunpack.c.h.b16 %v246
    %v359 = vunpack.c.l.b16 %v247
    %v360 = vunpack.c.h.b16 %v247
    %v361 = vunpack.c.l.b16 %v248
    %v362 = vunpack.c.h.b16 %v248
    %v363 = vunpack.c.l.b16 %v249
    %v364 = vunpack.c.h.b16 %v249
    %v365 = vunpack.c.l.b16 %v250
    %v366 = vunpack.c.h.b16 %v250
    %v367 = vunpack.c.l.b16 %v251
    %v368 = vunpack.c.h.b16 %v251
    %v369 = vunpack.c.l.b16 %v252
    %v370 = vunpack.c.h.b16 %v252
    %v371 = vunpack.c.l.b16 %v253
    %v372 = vunpack.c.h.b16 %v253
    %v373 = vunpack.c.l.b16 %v254
    %v374 = vunpack.c.h.b16 %v254
    %v375 = vunpack.c.l.b16 %v255
    %v376 = vunpack.c.h.b16 %v255
    %v377 = vunpack.c.l.b16 %v256
    %v378 = vunpack.c.h.b16 %v256
    %v379 = vunpack.c.l.b16 %v257
    %v380 = vunpack.c.h.b16 %v257
    %v381 = vunpack.c.l.b16 %v258
    %v382 = vunpack.c.h.b16 %v258
    %v383 = vunpack.c.l.b16 %v259
    %v384 = vunpack.c.h.b16 %v259
    %v385 = vunpack.c.l.b16 %v260
    %v386 = vunpack.c.h.b16 %v260
    %v387 = vunpack.c.l.b16 %v261
    %v388 = vunpack.c.h.b16 %v261
    %v389 = vunpack.c.l.b16 %v262
    %v390 = vunpack.c.h.b16 %v262
    %v391 = vunpack.c.l.b16 %v263
    %v392 = vunpack.c.h.b16 %v263
    %v393 = vunpack.c.l.b16 %v264
    %v394 = vunpack.c.h.b16 %v264
    %v395 = vunpack.c.l.b16 %v265
    %v396 = vunpack.c.h.b16 %v265
    %v397 = vunpack.c.l.b16 %v266
    %v398 = vunpack.c.h.b16 %v266
    %v399 = vpack.c.b16 %v351, %v335
    %v400 = vpack.c.b16 %v352, %v336
    %v401 = vpack.c.b16 %v353, %v337
    %v402 = vpack.c.b16 %v354, %v338
    %v403 = vpack.c.b16 %v355, %v339
    %v404 = vpack.c.b16 %v356, %v340
    %v405 = vpack.c.b16 %v357, %v341
    %v406 = vpack.c.b16 %v358, %v342
    %v407 = vpack.c.b16 %v359, %v343
    %v408 = vpack.c.b16 %v360, %v344
    %v409 = vpack.c.b16 %v361, %v345
    %v410 = vpack.c.b16 %v362, %v346
    %v411 = vpack.c.b16 %v363, %v347
    %v412 = vpack.c.b16 %v364, %v348
    %v413 = vpack.c.b16 %v365, %v349
    %v414 = vpack.c.b16 %v366, %v350
    %v415 = vpack.c.b16 %v383, %v367
    %v416 = vpack.c.b16 %v384, %v368
    %v417 = vpack.c.b16 %v385, %v369
    %v418 = vpack.c.b16 %v386, %v370
    %v419 = vpack.c.b16 %v387, %v371
    %v420 = vpack.c.b16 %v388, %v372
    %v421 = vpack.c.b16 %v389, %v373
    %v422 = vpack.c.b16 %v390, %v374
    %v423 = vpack.c.b16 %v391, %v375
    %v424 = vpack.c.b16 %v392, %v376
    %v425 = vpack.c.b16 %v393, %v377
    %v426 = vpack.c.b16 %v394, %v378
    %v427 = vpack.c.b16 %v395, %v379
    %v428 = vpack.c.b16 %v396, %v380
    %v429 = vpack.c.b16 %v397, %v381
    %v430 = vpack.c.b16 %v398, %v382
    %v464 = vsel %vm157, %v234, 0
    %466 = vmatpush.bf16.msra.mxu0 0
    %467 = vmatpush.bf16.msra.mxu0 0
    %468 = vmatpush.bf16.msra.mxu0 0
    %469 = vmatpush.bf16.msra.mxu0 0
    %470 = vmatpush.bf16.msra.mxu0 0
    %471 = vmatpush.bf16.msra.mxu0 0
    %472 = vmatpush.bf16.msra.mxu0 %v415
    %473 = vmatpush.bf16.msra.mxu0 %v399
    %474 = vmatmul.bf16.gmra.mxu0 %v464
    %v475 = vpop.f32.mrf.mxu0
    %v476 = vadd.f32 %v271, %v475
    %v477 = vpop.f32.mrf.mxu0
    %478 = vdwg.mxu0
    %479 = vmatpush.bf16.msra.mxu0 0
    %480 = vmatpush.bf16.msra.mxu0 0
    %481 = vmatpush.bf16.msra.mxu0 0
    %482 = vmatpush.bf16.msra.mxu0 0
    %483 = vmatpush.bf16.msra.mxu0 0
    %484 = vmatpush.bf16.msra.mxu0 0
    %485 = vmatpush.bf16.msra.mxu0 %v416
    %486 = vmatpush.bf16.msra.mxu0 %v400
    %487 = vmatmul.bf16.gmra.mxu0 %v464
    %v488 = vpop.f32.mrf.mxu0
    %v489 = vadd.f32 %v272, %v488
    %v490 = vpop.f32.mrf.mxu0
    %491 = vdwg.mxu0
    %492 = vmatpush.bf16.msra.mxu0 0
    %493 = vmatpush.bf16.msra.mxu0 0
    %494 = vmatpush.bf16.msra.mxu0 0
    %495 = vmatpush.bf16.msra.mxu0 0
    %496 = vmatpush.bf16.msra.mxu0 0
    %497 = vmatpush.bf16.msra.mxu0 0
    %498 = vmatpush.bf16.msra.mxu0 %v417
    %499 = vmatpush.bf16.msra.mxu0 %v401
    %500 = vmatmul.bf16.gmra.mxu0 %v464
    %v501 = vpop.f32.mrf.mxu0
    %v502 = vadd.f32 %v273, %v501
    %v503 = vpop.f32.mrf.mxu0
    %504 = vdwg.mxu0
    %505 = vmatpush.bf16.msra.mxu0 0
    %506 = vmatpush.bf16.msra.mxu0 0
    %507 = vmatpush.bf16.msra.mxu0 0
    %508 = vmatpush.bf16.msra.mxu0 0
    %509 = vmatpush.bf16.msra.mxu0 0
    %510 = vmatpush.bf16.msra.mxu0 0
    %511 = vmatpush.bf16.msra.mxu0 %v418
    %512 = vmatpush.bf16.msra.mxu0 %v402
    %513 = vmatmul.bf16.gmra.mxu0 %v464
    %v514 = vpop.f32.mrf.mxu0
    %v515 = vadd.f32 %v274, %v514
    %v516 = vpop.f32.mrf.mxu0
    %517 = vdwg.mxu0
    %518 = vmatpush.bf16.msra.mxu0 0
    %519 = vmatpush.bf16.msra.mxu0 0
    %520 = vmatpush.bf16.msra.mxu0 0
    %521 = vmatpush.bf16.msra.mxu0 0
    %522 = vmatpush.bf16.msra.mxu0 0
    %523 = vmatpush.bf16.msra.mxu0 0
    %524 = vmatpush.bf16.msra.mxu0 %v419
    %525 = vmatpush.bf16.msra.mxu0 %v403
    %526 = vmatmul.bf16.gmra.mxu0 %v464
    %v527 = vpop.f32.mrf.mxu0
    %v528 = vadd.f32 %v275, %v527
    %v529 = vpop.f32.mrf.mxu0
    %530 = vdwg.mxu0
    %531 = vmatpush.bf16.msra.mxu0 0
    %532 = vmatpush.bf16.msra.mxu0 0
    %533 = vmatpush.bf16.msra.mxu0 0
    %534 = vmatpush.bf16.msra.mxu0 0
    %535 = vmatpush.bf16.msra.mxu0 0
    %536 = vmatpush.bf16.msra.mxu0 0
    %537 = vmatpush.bf16.msra.mxu0 %v420
    %538 = vmatpush.bf16.msra.mxu0 %v404
    %539 = vmatmul.bf16.gmra.mxu0 %v464
    %v540 = vpop.f32.mrf.mxu0
    %v541 = vadd.f32 %v276, %v540
    %v542 = vpop.f32.mrf.mxu0
    %543 = vdwg.mxu0
    %544 = vmatpush.bf16.msra.mxu0 0
    %545 = vmatpush.bf16.msra.mxu0 0
    %546 = vmatpush.bf16.msra.mxu0 0
    %547 = vmatpush.bf16.msra.mxu0 0
    %548 = vmatpush.bf16.msra.mxu0 0
    %549 = vmatpush.bf16.msra.mxu0 0
    %550 = vmatpush.bf16.msra.mxu0 %v421
    %551 = vmatpush.bf16.msra.mxu0 %v405
    %552 = vmatmul.bf16.gmra.mxu0 %v464
    %v553 = vpop.f32.mrf.mxu0
    %v554 = vadd.f32 %v277, %v553
    %v555 = vpop.f32.mrf.mxu0
    %556 = vdwg.mxu0
    %557 = vmatpush.bf16.msra.mxu0 0
    %558 = vmatpush.bf16.msra.mxu0 0
    %559 = vmatpush.bf16.msra.mxu0 0
    %560 = vmatpush.bf16.msra.mxu0 0
    %561 = vmatpush.bf16.msra.mxu0 0
    %562 = vmatpush.bf16.msra.mxu0 0
    %563 = vmatpush.bf16.msra.mxu0 %v422
    %564 = vmatpush.bf16.msra.mxu0 %v406
    %565 = vmatmul.bf16.gmra.mxu0 %v464
    %v566 = vpop.f32.mrf.mxu0
    %v567 = vadd.f32 %v278, %v566
    %v568 = vpop.f32.mrf.mxu0
    %569 = vdwg.mxu0
    %570 = vmatpush.bf16.msra.mxu0 0
    %571 = vmatpush.bf16.msra.mxu0 0
    %572 = vmatpush.bf16.msra.mxu0 0
    %573 = vmatpush.bf16.msra.mxu0 0
    %574 = vmatpush.bf16.msra.mxu0 0
    %575 = vmatpush.bf16.msra.mxu0 0
    %576 = vmatpush.bf16.msra.mxu0 %v423
    %577 = vmatpush.bf16.msra.mxu0 %v407
    %578 = vmatmul.bf16.gmra.mxu0 %v464
    %v579 = vpop.f32.mrf.mxu0
    %v580 = vadd.f32 %v279, %v579
    %v581 = vpop.f32.mrf.mxu0
    %582 = vdwg.mxu0
    %583 = vmatpush.bf16.msra.mxu0 0
    %584 = vmatpush.bf16.msra.mxu0 0
    %585 = vmatpush.bf16.msra.mxu0 0
    %586 = vmatpush.bf16.msra.mxu0 0
    %587 = vmatpush.bf16.msra.mxu0 0
    %588 = vmatpush.bf16.msra.mxu0 0
    %589 = vmatpush.bf16.msra.mxu0 %v424
    %590 = vmatpush.bf16.msra.mxu0 %v408
    %591 = vmatmul.bf16.gmra.mxu0 %v464
    %v592 = vpop.f32.mrf.mxu0
    %v593 = vadd.f32 %v280, %v592
    %v594 = vpop.f32.mrf.mxu0
    %595 = vdwg.mxu0
    %596 = vmatpush.bf16.msra.mxu0 0
    %597 = vmatpush.bf16.msra.mxu0 0
    %598 = vmatpush.bf16.msra.mxu0 0
    %599 = vmatpush.bf16.msra.mxu0 0
    %600 = vmatpush.bf16.msra.mxu0 0
    %601 = vmatpush.bf16.msra.mxu0 0
    %602 = vmatpush.bf16.msra.mxu0 %v425
    %603 = vmatpush.bf16.msra.mxu0 %v409
    %604 = vmatmul.bf16.gmra.mxu0 %v464
    %v605 = vpop.f32.mrf.mxu0
    %v606 = vadd.f32 %v281, %v605
    %v607 = vpop.f32.mrf.mxu0
    %608 = vdwg.mxu0
    %609 = vmatpush.bf16.msra.mxu0 0
    %610 = vmatpush.bf16.msra.mxu0 0
    %611 = vmatpush.bf16.msra.mxu0 0
    %612 = vmatpush.bf16.msra.mxu0 0
    %613 = vmatpush.bf16.msra.mxu0 0
    %614 = vmatpush.bf16.msra.mxu0 0
    %615 = vmatpush.bf16.msra.mxu0 %v426
    %616 = vmatpush.bf16.msra.mxu0 %v410
    %617 = vmatmul.bf16.gmra.mxu0 %v464
    %v618 = vpop.f32.mrf.mxu0
    %v619 = vadd.f32 %v282, %v618
    %v620 = vpop.f32.mrf.mxu0
    %621 = vdwg.mxu0
    %622 = vmatpush.bf16.msra.mxu0 0
    %623 = vmatpush.bf16.msra.mxu0 0
    %624 = vmatpush.bf16.msra.mxu0 0
    %625 = vmatpush.bf16.msra.mxu0 0
    %626 = vmatpush.bf16.msra.mxu0 0
    %627 = vmatpush.bf16.msra.mxu0 0
    %628 = vmatpush.bf16.msra.mxu0 %v427
    %629 = vmatpush.bf16.msra.mxu0 %v411
    %630 = vmatmul.bf16.gmra.mxu0 %v464
    %v631 = vpop.f32.mrf.mxu0
    %v632 = vadd.f32 %v283, %v631
    %v633 = vpop.f32.mrf.mxu0
    %634 = vdwg.mxu0
    %635 = vmatpush.bf16.msra.mxu0 0
    %636 = vmatpush.bf16.msra.mxu0 0
    %637 = vmatpush.bf16.msra.mxu0 0
    %638 = vmatpush.bf16.msra.mxu0 0
    %639 = vmatpush.bf16.msra.mxu0 0
    %640 = vmatpush.bf16.msra.mxu0 0
    %641 = vmatpush.bf16.msra.mxu0 %v428
    %642 = vmatpush.bf16.msra.mxu0 %v412
    %643 = vmatmul.bf16.gmra.mxu0 %v464
    %v644 = vpop.f32.mrf.mxu0
    %v645 = vadd.f32 %v284, %v644
    %v646 = vpop.f32.mrf.mxu0
    %647 = vdwg.mxu0
    %648 = vmatpush.bf16.msra.mxu0 0
    %649 = vmatpush.bf16.msra.mxu0 0
    %650 = vmatpush.bf16.msra.mxu0 0
    %651 = vmatpush.bf16.msra.mxu0 0
    %652 = vmatpush.bf16.msra.mxu0 0
    %653 = vmatpush.bf16.msra.mxu0 0
    %654 = vmatpush.bf16.msra.mxu0 %v429
    %655 = vmatpush.bf16.msra.mxu0 %v413
    %656 = vmatmul.bf16.gmra.mxu0 %v464
    %v657 = vpop.f32.mrf.mxu0
    %v658 = vadd.f32 %v285, %v657
    %v659 = vpop.f32.mrf.mxu0
    %660 = vdwg.mxu0
    %661 = vmatpush.bf16.msra.mxu0 0
    %662 = vmatpush.bf16.msra.mxu0 0
    %663 = vmatpush.bf16.msra.mxu0 0
    %664 = vmatpush.bf16.msra.mxu0 0
    %665 = vmatpush.bf16.msra.mxu0 0
    %666 = vmatpush.bf16.msra.mxu0 0
    %667 = vmatpush.bf16.msra.mxu0 %v430
    %668 = vmatpush.bf16.msra.mxu0 %v414
    %669 = vmatmul.bf16.gmra.mxu0 %v464
    %v670 = vpop.f32.mrf.mxu0
    %v671 = vadd.f32 %v286, %v670
    %v672 = vpop.f32.mrf.mxu0
    %673 = vdwg.mxu0
    %v674 = vmax.f32 %v476, 0.0
    %v675 = vmax.f32 %v489, 0.0
    %v676 = vmax.f32 %v502, 0.0
    %v677 = vmax.f32 %v515, 0.0
    %v678 = vmax.f32 %v528, 0.0
    %v679 = vmax.f32 %v541, 0.0
    %v680 = vmax.f32 %v554, 0.0
    %v681 = vmax.f32 %v567, 0.0
    %v682 = vmax.f32 %v580, 0.0
    %v683 = vmax.f32 %v593, 0.0
    %v684 = vmax.f32 %v606, 0.0
    %v685 = vmax.f32 %v619, 0.0
    %v686 = vmax.f32 %v632, 0.0
    %v687 = vmax.f32 %v645, 0.0
    %v688 = vmax.f32 %v658, 0.0
    %v689 = vmax.f32 %v671, 0.0
    %v690 = vpack.c.bf16 %v674, %v674
    %v691 = vpack.c.bf16 %v675, %v675
    %v692 = vpack.c.bf16 %v676, %v676
    %v693 = vpack.c.bf16 %v677, %v677
    %v694 = vpack.c.bf16 %v678, %v678
    %v695 = vpack.c.bf16 %v679, %v679
    %v696 = vpack.c.bf16 %v680, %v680
    %v697 = vpack.c.bf16 %v681, %v681
    %v698 = vpack.c.bf16 %v682, %v682
    %v699 = vpack.c.bf16 %v683, %v683
    %v700 = vpack.c.bf16 %v684, %v684
    %v701 = vpack.c.bf16 %v685, %v685
    %v702 = vpack.c.bf16 %v686, %v686
    %v703 = vpack.c.bf16 %v687, %v687
    %v704 = vpack.c.bf16 %v688, %v688
    %v705 = vpack.c.bf16 %v689, %v689
    %v706 = vld [vmem:[#allocation7] sm:$0xff]
    %v707 = vld [vmem:[#allocation7 + $0x8] sm:$0xff]
    %v708 = vld [vmem:[#allocation7 + $0x10] sm:$0xff]
    %v709 = vld [vmem:[#allocation7 + $0x18] sm:$0xff]
    %v710 = vld [vmem:[#allocation7 + $0x20] sm:$0xff]
    %v711 = vld [vmem:[#allocation7 + $0x28] sm:$0xff]
    %v712 = vld [vmem:[#allocation7 + $0x30] sm:$0xff]
    %v713 = vld [vmem:[#allocation7 + $0x38] sm:$0xff]
    %v714 = vld [vmem:[#allocation7 + $0x40] sm:$0xff]
    %v715 = vld [vmem:[#allocation7 + $0x48] sm:$0xff]
    %v716 = vld [vmem:[#allocation7 + $0x50] sm:$0xff]
    %v717 = vld [vmem:[#allocation7 + $0x58] sm:$0xff]
    %v718 = vld [vmem:[#allocation7 + $0x60] sm:$0xff]
    %v719 = vld [vmem:[#allocation7 + $0x68] sm:$0xff]
    %v720 = vld [vmem:[#allocation7 + $0x70] sm:$0xff]
    %v721 = vld [vmem:[#allocation7 + $0x78] sm:$0xff]
    %v722 = vld [vmem:[#allocation7 + $0x80] sm:$0xff]
    %v723 = vld [vmem:[#allocation7 + $0x88] sm:$0xff]
    %v724 = vld [vmem:[#allocation7 + $0x90] sm:$0xff]
    %v725 = vld [vmem:[#allocation7 + $0x98] sm:$0xff]
    %v726 = vld [vmem:[#allocation7 + $0xa0] sm:$0xff]
    %v727 = vld [vmem:[#allocation7 + $0xa8] sm:$0xff]
    %v728 = vld [vmem:[#allocation7 + $0xb0] sm:$0xff]
    %v729 = vld [vmem:[#allocation7 + $0xb8] sm:$0xff]
    %v730 = vld [vmem:[#allocation7 + $0xc0] sm:$0xff]
    %v731 = vld [vmem:[#allocation7 + $0xc8] sm:$0xff]
    %v732 = vld [vmem:[#allocation7 + $0xd0] sm:$0xff]
    %v733 = vld [vmem:[#allocation7 + $0xd8] sm:$0xff]
    %v734 = vld [vmem:[#allocation7 + $0xe0] sm:$0xff]
    %v735 = vld [vmem:[#allocation7 + $0xe8] sm:$0xff]
    %v736 = vld [vmem:[#allocation7 + $0xf0] sm:$0xff]
    %v737 = vld [vmem:[#allocation7 + $0xf8] sm:$0xff]
    %v738 = vperm.slane %v138, 5
    %v771 = vunpack.c.l.b16 %v706
    %v772 = vunpack.c.h.b16 %v706
    %v773 = vunpack.c.l.b16 %v707
    %v774 = vunpack.c.h.b16 %v707
    %v775 = vunpack.c.l.b16 %v708
    %v776 = vunpack.c.h.b16 %v708
    %v777 = vunpack.c.l.b16 %v709
    %v778 = vunpack.c.h.b16 %v709
    %v779 = vunpack.c.l.b16 %v710
    %v780 = vunpack.c.h.b16 %v710
    %v781 = vunpack.c.l.b16 %v711
    %v782 = vunpack.c.h.b16 %v711
    %v783 = vunpack.c.l.b16 %v712
    %v784 = vunpack.c.h.b16 %v712
    %v785 = vunpack.c.l.b16 %v713
    %v786 = vunpack.c.h.b16 %v713
    %v787 = vunpack.c.l.b16 %v714
    %v788 = vunpack.c.h.b16 %v714
    %v789 = vunpack.c.l.b16 %v715
    %v790 = vunpack.c.h.b16 %v715
    %v791 = vunpack.c.l.b16 %v716
    %v792 = vunpack.c.h.b16 %v716
    %v793 = vunpack.c.l.b16 %v717
    %v794 = vunpack.c.h.b16 %v717
    %v795 = vunpack.c.l.b16 %v718
    %v796 = vunpack.c.h.b16 %v718
    %v797 = vunpack.c.l.b16 %v719
    %v798 = vunpack.c.h.b16 %v719
    %v799 = vunpack.c.l.b16 %v720
    %v800 = vunpack.c.h.b16 %v720
    %v801 = vunpack.c.l.b16 %v721
    %v802 = vunpack.c.h.b16 %v721
    %v803 = vunpack.c.l.b16 %v722
    %v804 = vunpack.c.h.b16 %v722
    %v805 = vunpack.c.l.b16 %v723
    %v806 = vunpack.c.h.b16 %v723
    %v807 = vunpack.c.l.b16 %v724
    %v808 = vunpack.c.h.b16 %v724
    %v809 = vunpack.c.l.b16 %v725
    %v810 = vunpack.c.h.b16 %v725
    %v811 = vunpack.c.l.b16 %v726
    %v812 = vunpack.c.h.b16 %v726
    %v813 = vunpack.c.l.b16 %v727
    %v814 = vunpack.c.h.b16 %v727
    %v815 = vunpack.c.l.b16 %v728
    %v816 = vunpack.c.h.b16 %v728
    %v817 = vunpack.c.l.b16 %v729
    %v818 = vunpack.c.h.b16 %v729
    %v819 = vunpack.c.l.b16 %v730
    %v820 = vunpack.c.h.b16 %v730
    %v821 = vunpack.c.l.b16 %v731
    %v822 = vunpack.c.h.b16 %v731
    %v823 = vunpack.c.l.b16 %v732
    %v824 = vunpack.c.h.b16 %v732
    %v825 = vunpack.c.l.b16 %v733
    %v826 = vunpack.c.h.b16 %v733
    %v827 = vunpack.c.l.b16 %v734
    %v828 = vunpack.c.h.b16 %v734
    %v829 = vunpack.c.l.b16 %v735
    %v830 = vunpack.c.h.b16 %v735
    %v831 = vunpack.c.l.b16 %v736
    %v832 = vunpack.c.h.b16 %v736
    %v833 = vunpack.c.l.b16 %v737
    %v834 = vunpack.c.h.b16 %v737
    %v835 = vpack.c.b16 %v787, %v771
    %v836 = vpack.c.b16 %v788, %v772
    %v837 = vpack.c.b16 %v789, %v773
    %v838 = vpack.c.b16 %v790, %v774
    %v839 = vpack.c.b16 %v791, %v775
    %v840 = vpack.c.b16 %v792, %v776
    %v841 = vpack.c.b16 %v793, %v777
    %v842 = vpack.c.b16 %v794, %v778
    %v843 = vpack.c.b16 %v795, %v779
    %v844 = vpack.c.b16 %v796, %v780
    %v845 = vpack.c.b16 %v797, %v781
    %v846 = vpack.c.b16 %v798, %v782
    %v847 = vpack.c.b16 %v799, %v783
    %v848 = vpack.c.b16 %v800, %v784
    %v849 = vpack.c.b16 %v801, %v785
    %v850 = vpack.c.b16 %v802, %v786
    %v851 = vpack.c.b16 %v819, %v803
    %v852 = vpack.c.b16 %v820, %v804
    %v853 = vpack.c.b16 %v821, %v805
    %v854 = vpack.c.b16 %v822, %v806
    %v855 = vpack.c.b16 %v823, %v807
    %v856 = vpack.c.b16 %v824, %v808
    %v857 = vpack.c.b16 %v825, %v809
    %v858 = vpack.c.b16 %v826, %v810
    %v859 = vpack.c.b16 %v827, %v811
    %v860 = vpack.c.b16 %v828, %v812
    %v861 = vpack.c.b16 %v829, %v813
    %v862 = vpack.c.b16 %v830, %v814
    %v863 = vpack.c.b16 %v831, %v815
    %v864 = vpack.c.b16 %v832, %v816
    %v865 = vpack.c.b16 %v833, %v817
    %v866 = vpack.c.b16 %v834, %v818
    %899 = vmatpush.bf16.xpose.msra.mxu0 0
    %900 = vmatpush.bf16.xpose.msra.mxu0 0
    %901 = vmatpush.bf16.xpose.msra.mxu0 0
    %902 = vmatpush.bf16.xpose.msra.mxu0 0
    %903 = vmatpush.bf16.xpose.msra.mxu0 0
    %904 = vmatpush.bf16.xpose.msra.mxu0 0
    %905 = vmatpush.bf16.xpose.msra.mxu0 %v851
    %906 = vmatpush.bf16.xpose.msra.mxu0 %v835
    %907 = vmatmul.bf16.gmra.mxu0 %v690
    %v908 = vpop.f32.mrf.mxu0
    %v909 = vadd.f32 %v738, %v908
    %v910 = vpop.f32.mrf.mxu0
    %911 = vdwg.mxu0
    %912 = vmatpush.bf16.xpose.msra.mxu0 0
    %913 = vmatpush.bf16.xpose.msra.mxu0 0
    %914 = vmatpush.bf16.xpose.msra.mxu0 0
    %915 = vmatpush.bf16.xpose.msra.mxu0 0
    %916 = vmatpush.bf16.xpose.msra.mxu0 0
    %917 = vmatpush.bf16.xpose.msra.mxu0 0
    %918 = vmatpush.bf16.xpose.msra.mxu0 %v852
    %919 = vmatpush.bf16.xpose.msra.mxu0 %v836
    %920 = vmatmul.bf16.gmra.mxu0 %v691
    %v921 = vpop.f32.mrf.mxu0
    %v922 = vadd.f32 %v909, %v921
    %v923 = vpop.f32.mrf.mxu0
    %924 = vdwg.mxu0
    %925 = vmatpush.bf16.xpose.msra.mxu0 0
    %926 = vmatpush.bf16.xpose.msra.mxu0 0
    %927 = vmatpush.bf16.xpose.msra.mxu0 0
    %928 = vmatpush.bf16.xpose.msra.mxu0 0
    %929 = vmatpush.bf16.xpose.msra.mxu0 0
    %930 = vmatpush.bf16.xpose.msra.mxu0 0
    %931 = vmatpush.bf16.xpose.msra.mxu0 %v853
    %932 = vmatpush.bf16.xpose.msra.mxu0 %v837
    %933 = vmatmul.bf16.gmra.mxu0 %v692
    %v934 = vpop.f32.mrf.mxu0
    %v935 = vadd.f32 %v922, %v934
    %v936 = vpop.f32.mrf.mxu0
    %937 = vdwg.mxu0
    %938 = vmatpush.bf16.xpose.msra.mxu0 0
    %939 = vmatpush.bf16.xpose.msra.mxu0 0
    %940 = vmatpush.bf16.xpose.msra.mxu0 0
    %941 = vmatpush.bf16.xpose.msra.mxu0 0
    %942 = vmatpush.bf16.xpose.msra.mxu0 0
    %943 = vmatpush.bf16.xpose.msra.mxu0 0
    %944 = vmatpush.bf16.xpose.msra.mxu0 %v854
    %945 = vmatpush.bf16.xpose.msra.mxu0 %v838
    %946 = vmatmul.bf16.gmra.mxu0 %v693
    %v947 = vpop.f32.mrf.mxu0
    %v948 = vadd.f32 %v935, %v947
    %v949 = vpop.f32.mrf.mxu0
    %950 = vdwg.mxu0
    %951 = vmatpush.bf16.xpose.msra.mxu0 0
    %952 = vmatpush.bf16.xpose.msra.mxu0 0
    %953 = vmatpush.bf16.xpose.msra.mxu0 0
    %954 = vmatpush.bf16.xpose.msra.mxu0 0
    %955 = vmatpush.bf16.xpose.msra.mxu0 0
    %956 = vmatpush.bf16.xpose.msra.mxu0 0
    %957 = vmatpush.bf16.xpose.msra.mxu0 %v855
    %958 = vmatpush.bf16.xpose.msra.mxu0 %v839
    %959 = vmatmul.bf16.gmra.mxu0 %v694
    %v960 = vpop.f32.mrf.mxu0
    %v961 = vadd.f32 %v948, %v960
    %v962 = vpop.f32.mrf.mxu0
    %963 = vdwg.mxu0
    %964 = vmatpush.bf16.xpose.msra.mxu0 0
    %965 = vmatpush.bf16.xpose.msra.mxu0 0
    %966 = vmatpush.bf16.xpose.msra.mxu0 0
    %967 = vmatpush.bf16.xpose.msra.mxu0 0
    %968 = vmatpush.bf16.xpose.msra.mxu0 0
    %969 = vmatpush.bf16.xpose.msra.mxu0 0
    %970 = vmatpush.bf16.xpose.msra.mxu0 %v856
    %971 = vmatpush.bf16.xpose.msra.mxu0 %v840
    %972 = vmatmul.bf16.gmra.mxu0 %v695
    %v973 = vpop.f32.mrf.mxu0
    %v974 = vadd.f32 %v961, %v973
    %v975 = vpop.f32.mrf.mxu0
    %976 = vdwg.mxu0
    %977 = vmatpush.bf16.xpose.msra.mxu0 0
    %978 = vmatpush.bf16.xpose.msra.mxu0 0
    %979 = vmatpush.bf16.xpose.msra.mxu0 0
    %980 = vmatpush.bf16.xpose.msra.mxu0 0
    %981 = vmatpush.bf16.xpose.msra.mxu0 0
    %982 = vmatpush.bf16.xpose.msra.mxu0 0
    %983 = vmatpush.bf16.xpose.msra.mxu0 %v857
    %984 = vmatpush.bf16.xpose.msra.mxu0 %v841
    %985 = vmatmul.bf16.gmra.mxu0 %v696
    %v986 = vpop.f32.mrf.mxu0
    %v987 = vadd.f32 %v974, %v986
    %v988 = vpop.f32.mrf.mxu0
    %989 = vdwg.mxu0
    %990 = vmatpush.bf16.xpose.msra.mxu0 0
    %991 = vmatpush.bf16.xpose.msra.mxu0 0
    %992 = vmatpush.bf16.xpose.msra.mxu0 0
    %993 = vmatpush.bf16.xpose.msra.mxu0 0
    %994 = vmatpush.bf16.xpose.msra.mxu0 0
    %995 = vmatpush.bf16.xpose.msra.mxu0 0
    %996 = vmatpush.bf16.xpose.msra.mxu0 %v858
    %997 = vmatpush.bf16.xpose.msra.mxu0 %v842
    %998 = vmatmul.bf16.gmra.mxu0 %v697
    %v999 = vpop.f32.mrf.mxu0
    %v1000 = vadd.f32 %v987, %v999
    %v1001 = vpop.f32.mrf.mxu0
    %1002 = vdwg.mxu0
    %1003 = vmatpush.bf16.xpose.msra.mxu0 0
    %1004 = vmatpush.bf16.xpose.msra.mxu0 0
    %1005 = vmatpush.bf16.xpose.msra.mxu0 0
    %1006 = vmatpush.bf16.xpose.msra.mxu0 0
    %1007 = vmatpush.bf16.xpose.msra.mxu0 0
    %1008 = vmatpush.bf16.xpose.msra.mxu0 0
    %1009 = vmatpush.bf16.xpose.msra.mxu0 %v859
    %1010 = vmatpush.bf16.xpose.msra.mxu0 %v843
    %1011 = vmatmul.bf16.gmra.mxu0 %v698
    %v1012 = vpop.f32.mrf.mxu0
    %v1013 = vadd.f32 %v1000, %v1012
    %v1014 = vpop.f32.mrf.mxu0
    %1015 = vdwg.mxu0
    %1016 = vmatpush.bf16.xpose.msra.mxu0 0
    %1017 = vmatpush.bf16.xpose.msra.mxu0 0
    %1018 = vmatpush.bf16.xpose.msra.mxu0 0
    %1019 = vmatpush.bf16.xpose.msra.mxu0 0
    %1020 = vmatpush.bf16.xpose.msra.mxu0 0
    %1021 = vmatpush.bf16.xpose.msra.mxu0 0
    %1022 = vmatpush.bf16.xpose.msra.mxu0 %v860
    %1023 = vmatpush.bf16.xpose.msra.mxu0 %v844
    %1024 = vmatmul.bf16.gmra.mxu0 %v699
    %v1025 = vpop.f32.mrf.mxu0
    %v1026 = vadd.f32 %v1013, %v1025
    %v1027 = vpop.f32.mrf.mxu0
    %1028 = vdwg.mxu0
    %1029 = vmatpush.bf16.xpose.msra.mxu0 0
    %1030 = vmatpush.bf16.xpose.msra.mxu0 0
    %1031 = vmatpush.bf16.xpose.msra.mxu0 0
    %1032 = vmatpush.bf16.xpose.msra.mxu0 0
    %1033 = vmatpush.bf16.xpose.msra.mxu0 0
    %1034 = vmatpush.bf16.xpose.msra.mxu0 0
    %1035 = vmatpush.bf16.xpose.msra.mxu0 %v861
    %1036 = vmatpush.bf16.xpose.msra.mxu0 %v845
    %1037 = vmatmul.bf16.gmra.mxu0 %v700
    %v1038 = vpop.f32.mrf.mxu0
    %v1039 = vadd.f32 %v1026, %v1038
    %v1040 = vpop.f32.mrf.mxu0
    %1041 = vdwg.mxu0
    %1042 = vmatpush.bf16.xpose.msra.mxu0 0
    %1043 = vmatpush.bf16.xpose.msra.mxu0 0
    %1044 = vmatpush.bf16.xpose.msra.mxu0 0
    %1045 = vmatpush.bf16.xpose.msra.mxu0 0
    %1046 = vmatpush.bf16.xpose.msra.mxu0 0
    %1047 = vmatpush.bf16.xpose.msra.mxu0 0
    %1048 = vmatpush.bf16.xpose.msra.mxu0 %v862
    %1049 = vmatpush.bf16.xpose.msra.mxu0 %v846
    %1050 = vmatmul.bf16.gmra.mxu0 %v701
    %v1051 = vpop.f32.mrf.mxu0
    %v1052 = vadd.f32 %v1039, %v1051
    %v1053 = vpop.f32.mrf.mxu0
    %1054 = vdwg.mxu0
    %1055 = vmatpush.bf16.xpose.msra.mxu0 0
    %1056 = vmatpush.bf16.xpose.msra.mxu0 0
    %1057 = vmatpush.bf16.xpose.msra.mxu0 0
    %1058 = vmatpush.bf16.xpose.msra.mxu0 0
    %1059 = vmatpush.bf16.xpose.msra.mxu0 0
    %1060 = vmatpush.bf16.xpose.msra.mxu0 0
    %1061 = vmatpush.bf16.xpose.msra.mxu0 %v863
    %1062 = vmatpush.bf16.xpose.msra.mxu0 %v847
    %1063 = vmatmul.bf16.gmra.mxu0 %v702
    %v1064 = vpop.f32.mrf.mxu0
    %v1065 = vadd.f32 %v1052, %v1064
    %v1066 = vpop.f32.mrf.mxu0
    %1067 = vdwg.mxu0
    %1068 = vmatpush.bf16.xpose.msra.mxu0 0
    %1069 = vmatpush.bf16.xpose.msra.mxu0 0
    %1070 = vmatpush.bf16.xpose.msra.mxu0 0
    %1071 = vmatpush.bf16.xpose.msra.mxu0 0
    %1072 = vmatpush.bf16.xpose.msra.mxu0 0
    %1073 = vmatpush.bf16.xpose.msra.mxu0 0
    %1074 = vmatpush.bf16.xpose.msra.mxu0 %v864
    %1075 = vmatpush.bf16.xpose.msra.mxu0 %v848
    %1076 = vmatmul.bf16.gmra.mxu0 %v703
    %v1077 = vpop.f32.mrf.mxu0
    %v1078 = vadd.f32 %v1065, %v1077
    %v1079 = vpop.f32.mrf.mxu0
    %1080 = vdwg.mxu0
    %1081 = vmatpush.bf16.xpose.msra.mxu0 0
    %1082 = vmatpush.bf16.xpose.msra.mxu0 0
    %1083 = vmatpush.bf16.xpose.msra.mxu0 0
    %1084 = vmatpush.bf16.xpose.msra.mxu0 0
    %1085 = vmatpush.bf16.xpose.msra.mxu0 0
    %1086 = vmatpush.bf16.xpose.msra.mxu0 0
    %1087 = vmatpush.bf16.xpose.msra.mxu0 %v865
    %1088 = vmatpush.bf16.xpose.msra.mxu0 %v849
    %1089 = vmatmul.bf16.gmra.mxu0 %v704
    %v1090 = vpop.f32.mrf.mxu0
    %v1091 = vadd.f32 %v1078, %v1090
    %v1092 = vpop.f32.mrf.mxu0
    %1093 = vdwg.mxu0
    %1094 = vmatpush.bf16.xpose.msra.mxu0 0
    %1095 = vmatpush.bf16.xpose.msra.mxu0 0
    %1096 = vmatpush.bf16.xpose.msra.mxu0 0
    %1097 = vmatpush.bf16.xpose.msra.mxu0 0
    %1098 = vmatpush.bf16.xpose.msra.mxu0 0
    %1099 = vmatpush.bf16.xpose.msra.mxu0 0
    %1100 = vmatpush.bf16.xpose.msra.mxu0 %v866
    %1101 = vmatpush.bf16.xpose.msra.mxu0 %v850
    %1102 = vmatmul.bf16.gmra.mxu0 %v705
    %v1103 = vpop.f32.mrf.mxu0
    %v1104 = vadd.f32 %v1091, %v1103
    %v1105 = vpop.f32.mrf.mxu0
    %1106 = vdwg.mxu0
    %v1107 = vadd.f32 %v233, %v1104
    %v1108 = vsel %vm157, %v1107, 0.0
    %1109 = vadd.xlane.f32.xlu0 %v1108
    %v1110 = vpop.xlane.xlu0 %1109
    %v1111 = vmul.f32 %v1110, %v184
    %v1112 = vsub.f32 %v1107, %v1111
    %v1113 = vmul.f32 %v1112, %v1112
    %v1114 = vsel %vm157, %v1113, 0.0
    %1115 = vadd.xlane.f32.xlu0 %v1114
    %v1116 = vpop.xlane.xlu0 %1115
    %v1117 = vmul.f32 %v1116, %v184
    %v1118 = vadd.f32 %v1117, 1e-05
    %v1119 = vrsqrt.pop %v1118
    %v1120 = vmul.f32 %v1119, %v1118
    %v1121 = vmul.f32 %v1120, %v1119
    %v1122 = vmul.f32 0.5, %v1121
    %v1123 = vsub.f32 1.5, %v1122
    %v1124 = vmul.f32 %v1119, %v1123
    %vm1125 = vweird.f32 %v1118
    %vm1126 = vweird.f32 %v1119
    %vm1127 = vmor %vm1125, %vm1126
    %v1128 = vsel %vm1127, %v1119, %v1124
    %v1129 = vmul.f32 %v1112, %v1128
    %v1130 = vperm.slane %v138, 6
    %v1131 = vmul.f32 %v1129, %v1130
    %v1132 = vperm.slane %v138, 7
    %v1133 = vadd.f32 %v1131, %v1132
    %s1134 = scalar_lea.vmem [#allocation10], 8
    %v1135 = vld [vmem:[%s1134] sm:$0xff]
    %v1136 = vpack.c.bf16 %v1133, %v1133
    %s1137 = scalar_lea.vmem [#allocation4], 16
    %v1138 = vld [vmem:[%s1137] sm:$0xf]
    %v1139 = vld [vmem:[%s1137 + $0x4] sm:$0xf]
    %v1140 = vld [vmem:[%s1137 + $0x8] sm:$0xf]
    %v1141 = vld [vmem:[%s1137 + $0xc] sm:$0xf]
    %v1142 = vperm.slane %v1135, 0
    %v1147 = vunpack.c.l.b16 %v1138
    %v1148 = vunpack.c.l.b16 %v1139
    %v1149 = vunpack.c.l.b16 %v1140
    %v1150 = vunpack.c.l.b16 %v1141
    %v1151 = vpack.c.b16 %v1148, %v1147
    %v1152 = vpack.c.b16 %v1150, %v1149
    %v1156 = vsel %vm157, %v1136, 0
    %1158 = vmatpush.bf16.msra.mxu0 0
    %1159 = vmatpush.bf16.msra.mxu0 0
    %1160 = vmatpush.bf16.msra.mxu0 0
    %1161 = vmatpush.bf16.msra.mxu0 0
    %1162 = vmatpush.bf16.msra.mxu0 0
    %1163 = vmatpush.bf16.msra.mxu0 0
    %1164 = vmatpush.bf16.msra.mxu0 %v1152
    %1165 = vmatpush.bf16.msra.mxu0 %v1151
    %1166 = vmatmul.bf16.gmra.mxu0 %v1156
    %v1167 = vpop.f32.mrf.mxu0
    %v1168 = vadd.f32 %v1142, %v1167
    %v1169 = vpop.f32.mrf.mxu0
    %1170 = vdwg.mxu0
    %v1171 = vadd.f32 %v1133, %v1168
    %v1172 = vsel %vm157, %v1171, 0.0
    %1173 = vadd.xlane.f32.xlu0 %v1172
    %v1174 = vpop.xlane.xlu0 %1173
    %v1175 = vmul.f32 %v1174, %v184
    %v1176 = vsub.f32 %v1171, %v1175
    %v1177 = vmul.f32 %v1176, %v1176
    %v1178 = vsel %vm157, %v1177, 0.0
    %1179 = vadd.xlane.f32.xlu0 %v1178
    %v1180 = vpop.xlane.xlu0 %1179
    %v1181 = vmul.f32 %v1180, %v184
    %v1182 = vadd.f32 %v1181, 1e-05
    %v1183 = vrsqrt.pop %v1182
    %v1184 = vmul.f32 %v1183, %v1182
    %v1185 = vmul.f32 %v1184, %v1183
    %v1186 = vmul.f32 0.5, %v1185
    %v1187 = vsub.f32 1.5, %v1186
    %v1188 = vmul.f32 %v1183, %v1187
    %vm1189 = vweird.f32 %v1182
    %vm1190 = vweird.f32 %v1183
    %vm1191 = vmor %vm1189, %vm1190
    %v1192 = vsel %vm1191, %v1183, %v1188
    %v1193 = vmul.f32 %v1176, %v1192
    %v1194 = vperm.slane %v1135, 1
    %v1195 = vmul.f32 %v1193, %v1194
    %v1196 = vperm.slane %v1135, 2
    %v1197 = vadd.f32 %v1195, %v1196
    %v1198 = vsel %vm157, %v1197, 0.0
    %1199 = vadd.xlane.f32.xlu0 %v1198
    %v1200 = vpop.xlane.xlu0 %1199
    %v1201 = vmul.f32 %v1200, %v184
    %v1202 = vsub.f32 %v1197, %v1201
    %v1203 = vmul.f32 %v1202, %v1202
    %v1204 = vsel %vm157, %v1203, 0.0
    %1205 = vadd.xlane.f32.xlu0 %v1204
    %v1206 = vpop.xlane.xlu0 %1205
    %v1207 = vmul.f32 %v1206, %v184
    %v1208 = vadd.f32 %v1207, 1e-05
    %v1209 = vrsqrt.pop %v1208
    %v1210 = vmul.f32 %v1209, %v1208
    %v1211 = vmul.f32 %v1210, %v1209
    %v1212 = vmul.f32 0.5, %v1211
    %v1213 = vsub.f32 1.5, %v1212
    %v1214 = vmul.f32 %v1209, %v1213
    %vm1215 = vweird.f32 %v1208
    %vm1216 = vweird.f32 %v1209
    %vm1217 = vmor %vm1215, %vm1216
    %v1218 = vsel %vm1217, %v1209, %v1214
    %v1219 = vmul.f32 %v1202, %v1218
    %v1220 = vperm.slane %v1135, 3
    %v1221 = vmul.f32 %v1219, %v1220
    %v1222 = vperm.slane %v1135, 4
    %v1223 = vadd.f32 %v1221, %v1222
    %v1224 = vpack.c.bf16 %v1223, %v1223
    %s1225 = scalar_lea.vmem [#allocation6], 256
    %v1226 = vld [vmem:[%s1225] sm:$0xff]
    %v1227 = vld [vmem:[%s1225 + $0x8] sm:$0xff]
    %v1228 = vld [vmem:[%s1225 + $0x10] sm:$0xff]
    %v1229 = vld [vmem:[%s1225 + $0x18] sm:$0xff]
    %v1230 = vld [vmem:[%s1225 + $0x20] sm:$0xff]
    %v1231 = vld [vmem:[%s1225 + $0x28] sm:$0xff]
    %v1232 = vld [vmem:[%s1225 + $0x30] sm:$0xff]
    %v1233 = vld [vmem:[%s1225 + $0x38] sm:$0xff]
    %v1234 = vld [vmem:[%s1225 + $0x40] sm:$0xff]
    %v1235 = vld [vmem:[%s1225 + $0x48] sm:$0xff]
    %v1236 = vld [vmem:[%s1225 + $0x50] sm:$0xff]
    %v1237 = vld [vmem:[%s1225 + $0x58] sm:$0xff]
    %v1238 = vld [vmem:[%s1225 + $0x60] sm:$0xff]
    %v1239 = vld [vmem:[%s1225 + $0x68] sm:$0xff]
    %v1240 = vld [vmem:[%s1225 + $0x70] sm:$0xff]
    %v1241 = vld [vmem:[%s1225 + $0x78] sm:$0xff]
    %v1242 = vld [vmem:[%s1225 + $0x80] sm:$0xff]
    %v1243 = vld [vmem:[%s1225 + $0x88] sm:$0xff]
    %v1244 = vld [vmem:[%s1225 + $0x90] sm:$0xff]
    %v1245 = vld [vmem:[%s1225 + $0x98] sm:$0xff]
    %v1246 = vld [vmem:[%s1225 + $0xa0] sm:$0xff]
    %v1247 = vld [vmem:[%s1225 + $0xa8] sm:$0xff]
    %v1248 = vld [vmem:[%s1225 + $0xb0] sm:$0xff]
    %v1249 = vld [vmem:[%s1225 + $0xb8] sm:$0xff]
    %v1250 = vld [vmem:[%s1225 + $0xc0] sm:$0xff]
    %v1251 = vld [vmem:[%s1225 + $0xc8] sm:$0xff]
    %v1252 = vld [vmem:[%s1225 + $0xd0] sm:$0xff]
    %v1253 = vld [vmem:[%s1225 + $0xd8] sm:$0xff]
    %v1254 = vld [vmem:[%s1225 + $0xe0] sm:$0xff]
    %v1255 = vld [vmem:[%s1225 + $0xe8] sm:$0xff]
    %v1256 = vld [vmem:[%s1225 + $0xf0] sm:$0xff]
    %v1257 = vld [vmem:[%s1225 + $0xf8] sm:$0xff]
    %s1258 = scalar_lea.vmem [#allocation9], 16
    %v1259 = vld [vmem:[%s1258] sm:$0xff]
    %v1260 = vld [vmem:[%s1258 + $0x8] sm:$0xff]
    %v1263 = vperm.slane %v1259, 0
    %v1264 = vperm.slane %v1259, 1
    %v1265 = vperm.slane %v1259, 2
    %v1266 = vperm.slane %v1259, 3
    %v1267 = vperm.slane %v1259, 4
    %v1268 = vperm.slane %v1259, 5
    %v1269 = vperm.slane %v1259, 6
    %v1270 = vperm.slane %v1259, 7
    %v1271 = vperm.slane %v1260, 0
    %v1272 = vperm.slane %v1260, 1
    %v1273 = vperm.slane %v1260, 2
    %v1274 = vperm.slane %v1260, 3
    %v1275 = vperm.slane %v1260, 4
    %v1276 = vperm.slane %v1260, 5
    %v1277 = vperm.slane %v1260, 6
    %v1278 = vperm.slane %v1260, 7
    %v1327 = vunpack.c.l.b16 %v1226
    %v1328 = vunpack.c.h.b16 %v1226
    %v1329 = vunpack.c.l.b16 %v1227
    %v1330 = vunpack.c.h.b16 %v1227
    %v1331 = vunpack.c.l.b16 %v1228
    %v1332 = vunpack.c.h.b16 %v1228
    %v1333 = vunpack.c.l.b16 %v1229
    %v1334 = vunpack.c.h.b16 %v1229
    %v1335 = vunpack.c.l.b16 %v1230
    %v1336 = vunpack.c.h.b16 %v1230
    %v1337 = vunpack.c.l.b16 %v1231
    %v1338 = vunpack.c.h.b16 %v1231
    %v1339 = vunpack.c.l.b16 %v1232
    %v1340 = vunpack.c.h.b16 %v1232
    %v1341 = vunpack.c.l.b16 %v1233
    %v1342 = vunpack.c.h.b16 %v1233
    %v1343 = vunpack.c.l.b16 %v1234
    %v1344 = vunpack.c.h.b16 %v1234
    %v1345 = vunpack.c.l.b16 %v1235
    %v1346 = vunpack.c.h.b16 %v1235
    %v1347 = vunpack.c.l.b16 %v1236
    %v1348 = vunpack.c.h.b16 %v1236
    %v1349 = vunpack.c.l.b16 %v1237
    %v1350 = vunpack.c.h.b16 %v1237
    %v1351 = vunpack.c.l.b16 %v1238
    %v1352 = vunpack.c.h.b16 %v1238
    %v1353 = vunpack.c.l.b16 %v1239
    %v1354 = vunpack.c.h.b16 %v1239
    %v1355 = vunpack.c.l.b16 %v1240
    %v1356 = vunpack.c.h.b16 %v1240
    %v1357 = vunpack.c.l.b16 %v1241
    %v1358 = vunpack.c.h.b16 %v1241
    %v1359 = vunpack.c.l.b16 %v1242
    %v1360 = vunpack.c.h.b16 %v1242
    %v1361 = vunpack.c.l.b16 %v1243
    %v1362 = vunpack.c.h.b16 %v1243
    %v1363 = vunpack.c.l.b16 %v1244
    %v1364 = vunpack.c.h.b16 %v1244
    %v1365 = vunpack.c.l.b16 %v1245
    %v1366 = vunpack.c.h.b16 %v1245
    %v1367 = vunpack.c.l.b16 %v1246
    %v1368 = vunpack.c.h.b16 %v1246
    %v1369 = vunpack.c.l.b16 %v1247
    %v1370 = vunpack.c.h.b16 %v1247
    %v1371 = vunpack.c.l.b16 %v1248
    %v1372 = vunpack.c.h.b16 %v1248
    %v1373 = vunpack.c.l.b16 %v1249
    %v1374 = vunpack.c.h.b16 %v1249
    %v1375 = vunpack.c.l.b16 %v1250
    %v1376 = vunpack.c.h.b16 %v1250
    %v1377 = vunpack.c.l.b16 %v1251
    %v1378 = vunpack.c.h.b16 %v1251
    %v1379 = vunpack.c.l.b16 %v1252
    %v1380 = vunpack.c.h.b16 %v1252
    %v1381 = vunpack.c.l.b16 %v1253
    %v1382 = vunpack.c.h.b16 %v1253
    %v1383 = vunpack.c.l.b16 %v1254
    %v1384 = vunpack.c.h.b16 %v1254
    %v1385 = vunpack.c.l.b16 %v1255
    %v1386 = vunpack.c.h.b16 %v1255
    %v1387 = vunpack.c.l.b16 %v1256
    %v1388 = vunpack.c.h.b16 %v1256
    %v1389 = vunpack.c.l.b16 %v1257
    %v1390 = vunpack.c.h.b16 %v1257
    %v1391 = vpack.c.b16 %v1343, %v1327
    %v1392 = vpack.c.b16 %v1344, %v1328
    %v1393 = vpack.c.b16 %v1345, %v1329
    %v1394 = vpack.c.b16 %v1346, %v1330
    %v1395 = vpack.c.b16 %v1347, %v1331
    %v1396 = vpack.c.b16 %v1348, %v1332
    %v1397 = vpack.c.b16 %v1349, %v1333
    %v1398 = vpack.c.b16 %v1350, %v1334
    %v1399 = vpack.c.b16 %v1351, %v1335
    %v1400 = vpack.c.b16 %v1352, %v1336
    %v1401 = vpack.c.b16 %v1353, %v1337
    %v1402 = vpack.c.b16 %v1354, %v1338
    %v1403 = vpack.c.b16 %v1355, %v1339
    %v1404 = vpack.c.b16 %v1356, %v1340
    %v1405 = vpack.c.b16 %v1357, %v1341
    %v1406 = vpack.c.b16 %v1358, %v1342
    %v1407 = vpack.c.b16 %v1375, %v1359
    %v1408 = vpack.c.b16 %v1376, %v1360
    %v1409 = vpack.c.b16 %v1377, %v1361
    %v1410 = vpack.c.b16 %v1378, %v1362
    %v1411 = vpack.c.b16 %v1379, %v1363
    %v1412 = vpack.c.b16 %v1380, %v1364
    %v1413 = vpack.c.b16 %v1381, %v1365
    %v1414 = vpack.c.b16 %v1382, %v1366
    %v1415 = vpack.c.b16 %v1383, %v1367
    %v1416 = vpack.c.b16 %v1384, %v1368
    %v1417 = vpack.c.b16 %v1385, %v1369
    %v1418 = vpack.c.b16 %v1386, %v1370
    %v1419 = vpack.c.b16 %v1387, %v1371
    %v1420 = vpack.c.b16 %v1388, %v1372
    %v1421 = vpack.c.b16 %v1389, %v1373
    %v1422 = vpack.c.b16 %v1390, %v1374
    %v1456 = vsel %vm157, %v1224, 0
    %1458 = vmatpush.bf16.msra.mxu0 0
    %1459 = vmatpush.bf16.msra.mxu0 0
    %1460 = vmatpush.bf16.msra.mxu0 0
    %1461 = vmatpush.bf16.msra.mxu0 0
    %1462 = vmatpush.bf16.msra.mxu0 0
    %1463 = vmatpush.bf16.msra.mxu0 0
    %1464 = vmatpush.bf16.msra.mxu0 %v1407
    %1465 = vmatpush.bf16.msra.mxu0 %v1391
    %1466 = vmatmul.bf16.gmra.mxu0 %v1456
    %v1467 = vpop.f32.mrf.mxu0
    %v1468 = vadd.f32 %v1263, %v1467
    %v1469 = vpop.f32.mrf.mxu0
    %1470 = vdwg.mxu0
    %1471 = vmatpush.bf16.msra.mxu0 0
    %1472 = vmatpush.bf16.msra.mxu0 0
    %1473 = vmatpush.bf16.msra.mxu0 0
    %1474 = vmatpush.bf16.msra.mxu0 0
    %1475 = vmatpush.bf16.msra.mxu0 0
    %1476 = vmatpush.bf16.msra.mxu0 0
    %1477 = vmatpush.bf16.msra.mxu0 %v1408
    %1478 = vmatpush.bf16.msra.mxu0 %v1392
    %1479 = vmatmul.bf16.gmra.mxu0 %v1456
    %v1480 = vpop.f32.mrf.mxu0
    %v1481 = vadd.f32 %v1264, %v1480
    %v1482 = vpop.f32.mrf.mxu0
    %1483 = vdwg.mxu0
    %1484 = vmatpush.bf16.msra.mxu0 0
    %1485 = vmatpush.bf16.msra.mxu0 0
    %1486 = vmatpush.bf16.msra.mxu0 0
    %1487 = vmatpush.bf16.msra.mxu0 0
    %1488 = vmatpush.bf16.msra.mxu0 0
    %1489 = vmatpush.bf16.msra.mxu0 0
    %1490 = vmatpush.bf16.msra.mxu0 %v1409
    %1491 = vmatpush.bf16.msra.mxu0 %v1393
    %1492 = vmatmul.bf16.gmra.mxu0 %v1456
    %v1493 = vpop.f32.mrf.mxu0
    %v1494 = vadd.f32 %v1265, %v1493
    %v1495 = vpop.f32.mrf.mxu0
    %1496 = vdwg.mxu0
    %1497 = vmatpush.bf16.msra.mxu0 0
    %1498 = vmatpush.bf16.msra.mxu0 0
    %1499 = vmatpush.bf16.msra.mxu0 0
    %1500 = vmatpush.bf16.msra.mxu0 0
    %1501 = vmatpush.bf16.msra.mxu0 0
    %1502 = vmatpush.bf16.msra.mxu0 0
    %1503 = vmatpush.bf16.msra.mxu0 %v1410
    %1504 = vmatpush.bf16.msra.mxu0 %v1394
    %1505 = vmatmul.bf16.gmra.mxu0 %v1456
    %v1506 = vpop.f32.mrf.mxu0
    %v1507 = vadd.f32 %v1266, %v1506
    %v1508 = vpop.f32.mrf.mxu0
    %1509 = vdwg.mxu0
    %1510 = vmatpush.bf16.msra.mxu0 0
    %1511 = vmatpush.bf16.msra.mxu0 0
    %1512 = vmatpush.bf16.msra.mxu0 0
    %1513 = vmatpush.bf16.msra.mxu0 0
    %1514 = vmatpush.bf16.msra.mxu0 0
    %1515 = vmatpush.bf16.msra.mxu0 0
    %1516 = vmatpush.bf16.msra.mxu0 %v1411
    %1517 = vmatpush.bf16.msra.mxu0 %v1395
    %1518 = vmatmul.bf16.gmra.mxu0 %v1456
    %v1519 = vpop.f32.mrf.mxu0
    %v1520 = vadd.f32 %v1267, %v1519
    %v1521 = vpop.f32.mrf.mxu0
    %1522 = vdwg.mxu0
    %1523 = vmatpush.bf16.msra.mxu0 0
    %1524 = vmatpush.bf16.msra.mxu0 0
    %1525 = vmatpush.bf16.msra.mxu0 0
    %1526 = vmatpush.bf16.msra.mxu0 0
    %1527 = vmatpush.bf16.msra.mxu0 0
    %1528 = vmatpush.bf16.msra.mxu0 0
    %1529 = vmatpush.bf16.msra.mxu0 %v1412
    %1530 = vmatpush.bf16.msra.mxu0 %v1396
    %1531 = vmatmul.bf16.gmra.mxu0 %v1456
    %v1532 = vpop.f32.mrf.mxu0
    %v1533 = vadd.f32 %v1268, %v1532
    %v1534 = vpop.f32.mrf.mxu0
    %1535 = vdwg.mxu0
    %1536 = vmatpush.bf16.msra.mxu0 0
    %1537 = vmatpush.bf16.msra.mxu0 0
    %1538 = vmatpush.bf16.msra.mxu0 0
    %1539 = vmatpush.bf16.msra.mxu0 0
    %1540 = vmatpush.bf16.msra.mxu0 0
    %1541 = vmatpush.bf16.msra.mxu0 0
    %1542 = vmatpush.bf16.msra.mxu0 %v1413
    %1543 = vmatpush.bf16.msra.mxu0 %v1397
    %1544 = vmatmul.bf16.gmra.mxu0 %v1456
    %v1545 = vpop.f32.mrf.mxu0
    %v1546 = vadd.f32 %v1269, %v1545
    %v1547 = vpop.f32.mrf.mxu0
    %1548 = vdwg.mxu0
    %1549 = vmatpush.bf16.msra.mxu0 0
    %1550 = vmatpush.bf16.msra.mxu0 0
    %1551 = vmatpush.bf16.msra.mxu0 0
    %1552 = vmatpush.bf16.msra.mxu0 0
    %1553 = vmatpush.bf16.msra.mxu0 0
    %1554 = vmatpush.bf16.msra.mxu0 0
    %1555 = vmatpush.bf16.msra.mxu0 %v1414
    %1556 = vmatpush.bf16.msra.mxu0 %v1398
    %1557 = vmatmul.bf16.gmra.mxu0 %v1456
    %v1558 = vpop.f32.mrf.mxu0
    %v1559 = vadd.f32 %v1270, %v1558
    %v1560 = vpop.f32.mrf.mxu0
    %1561 = vdwg.mxu0
    %1562 = vmatpush.bf16.msra.mxu0 0
    %1563 = vmatpush.bf16.msra.mxu0 0
    %1564 = vmatpush.bf16.msra.mxu0 0
    %1565 = vmatpush.bf16.msra.mxu0 0
    %1566 = vmatpush.bf16.msra.mxu0 0
    %1567 = vmatpush.bf16.msra.mxu0 0
    %1568 = vmatpush.bf16.msra.mxu0 %v1415
    %1569 = vmatpush.bf16.msra.mxu0 %v1399
    %1570 = vmatmul.bf16.gmra.mxu0 %v1456
    %v1571 = vpop.f32.mrf.mxu0
    %v1572 = vadd.f32 %v1271, %v1571
    %v1573 = vpop.f32.mrf.mxu0
    %1574 = vdwg.mxu0
    %1575 = vmatpush.bf16.msra.mxu0 0
    %1576 = vmatpush.bf16.msra.mxu0 0
    %1577 = vmatpush.bf16.msra.mxu0 0
    %1578 = vmatpush.bf16.msra.mxu0 0
    %1579 = vmatpush.bf16.msra.mxu0 0
    %1580 = vmatpush.bf16.msra.mxu0 0
    %1581 = vmatpush.bf16.msra.mxu0 %v1416
    %1582 = vmatpush.bf16.msra.mxu0 %v1400
    %1583 = vmatmul.bf16.gmra.mxu0 %v1456
    %v1584 = vpop.f32.mrf.mxu0
    %v1585 = vadd.f32 %v1272, %v1584
    %v1586 = vpop.f32.mrf.mxu0
    %1587 = vdwg.mxu0
    %1588 = vmatpush.bf16.msra.mxu0 0
    %1589 = vmatpush.bf16.msra.mxu0 0
    %1590 = vmatpush.bf16.msra.mxu0 0
    %1591 = vmatpush.bf16.msra.mxu0 0
    %1592 = vmatpush.bf16.msra.mxu0 0
    %1593 = vmatpush.bf16.msra.mxu0 0
    %1594 = vmatpush.bf16.msra.mxu0 %v1417
    %1595 = vmatpush.bf16.msra.mxu0 %v1401
    %1596 = vmatmul.bf16.gmra.mxu0 %v1456
    %v1597 = vpop.f32.mrf.mxu0
    %v1598 = vadd.f32 %v1273, %v1597
    %v1599 = vpop.f32.mrf.mxu0
    %1600 = vdwg.mxu0
    %1601 = vmatpush.bf16.msra.mxu0 0
    %1602 = vmatpush.bf16.msra.mxu0 0
    %1603 = vmatpush.bf16.msra.mxu0 0
    %1604 = vmatpush.bf16.msra.mxu0 0
    %1605 = vmatpush.bf16.msra.mxu0 0
    %1606 = vmatpush.bf16.msra.mxu0 0
    %1607 = vmatpush.bf16.msra.mxu0 %v1418
    %1608 = vmatpush.bf16.msra.mxu0 %v1402
    %1609 = vmatmul.bf16.gmra.mxu0 %v1456
    %v1610 = vpop.f32.mrf.mxu0
    %v1611 = vadd.f32 %v1274, %v1610
    %v1612 = vpop.f32.mrf.mxu0
    %1613 = vdwg.mxu0
    %1614 = vmatpush.bf16.msra.mxu0 0
    %1615 = vmatpush.bf16.msra.mxu0 0
    %1616 = vmatpush.bf16.msra.mxu0 0
    %1617 = vmatpush.bf16.msra.mxu0 0
    %1618 = vmatpush.bf16.msra.mxu0 0
    %1619 = vmatpush.bf16.msra.mxu0 0
    %1620 = vmatpush.bf16.msra.mxu0 %v1419
    %1621 = vmatpush.bf16.msra.mxu0 %v1403
    %1622 = vmatmul.bf16.gmra.mxu0 %v1456
    %v1623 = vpop.f32.mrf.mxu0
    %v1624 = vadd.f32 %v1275, %v1623
    %v1625 = vpop.f32.mrf.mxu0
    %1626 = vdwg.mxu0
    %1627 = vmatpush.bf16.msra.mxu0 0
    %1628 = vmatpush.bf16.msra.mxu0 0
    %1629 = vmatpush.bf16.msra.mxu0 0
    %1630 = vmatpush.bf16.msra.mxu0 0
    %1631 = vmatpush.bf16.msra.mxu0 0
    %1632 = vmatpush.bf16.msra.mxu0 0
    %1633 = vmatpush.bf16.msra.mxu0 %v1420
    %1634 = vmatpush.bf16.msra.mxu0 %v1404
    %1635 = vmatmul.bf16.gmra.mxu0 %v1456
    %v1636 = vpop.f32.mrf.mxu0
    %v1637 = vadd.f32 %v1276, %v1636
    %v1638 = vpop.f32.mrf.mxu0
    %1639 = vdwg.mxu0
    %1640 = vmatpush.bf16.msra.mxu0 0
    %1641 = vmatpush.bf16.msra.mxu0 0
    %1642 = vmatpush.bf16.msra.mxu0 0
    %1643 = vmatpush.bf16.msra.mxu0 0
    %1644 = vmatpush.bf16.msra.mxu0 0
    %1645 = vmatpush.bf16.msra.mxu0 0
    %1646 = vmatpush.bf16.msra.mxu0 %v1421
    %1647 = vmatpush.bf16.msra.mxu0 %v1405
    %1648 = vmatmul.bf16.gmra.mxu0 %v1456
    %v1649 = vpop.f32.mrf.mxu0
    %v1650 = vadd.f32 %v1277, %v1649
    %v1651 = vpop.f32.mrf.mxu0
    %1652 = vdwg.mxu0
    %1653 = vmatpush.bf16.msra.mxu0 0
    %1654 = vmatpush.bf16.msra.mxu0 0
    %1655 = vmatpush.bf16.msra.mxu0 0
    %1656 = vmatpush.bf16.msra.mxu0 0
    %1657 = vmatpush.bf16.msra.mxu0 0
    %1658 = vmatpush.bf16.msra.mxu0 0
    %1659 = vmatpush.bf16.msra.mxu0 %v1422
    %1660 = vmatpush.bf16.msra.mxu0 %v1406
    %1661 = vmatmul.bf16.gmra.mxu0 %v1456
    %v1662 = vpop.f32.mrf.mxu0
    %v1663 = vadd.f32 %v1278, %v1662
    %v1664 = vpop.f32.mrf.mxu0
    %1665 = vdwg.mxu0
    %v1666 = vmax.f32 %v1468, 0.0
    %v1667 = vmax.f32 %v1481, 0.0
    %v1668 = vmax.f32 %v1494, 0.0
    %v1669 = vmax.f32 %v1507, 0.0
    %v1670 = vmax.f32 %v1520, 0.0
    %v1671 = vmax.f32 %v1533, 0.0
    %v1672 = vmax.f32 %v1546, 0.0
    %v1673 = vmax.f32 %v1559, 0.0
    %v1674 = vmax.f32 %v1572, 0.0
    %v1675 = vmax.f32 %v1585, 0.0
    %v1676 = vmax.f32 %v1598, 0.0
    %v1677 = vmax.f32 %v1611, 0.0
    %v1678 = vmax.f32 %v1624, 0.0
    %v1679 = vmax.f32 %v1637, 0.0
    %v1680 = vmax.f32 %v1650, 0.0
    %v1681 = vmax.f32 %v1663, 0.0
    %v1682 = vpack.c.bf16 %v1666, %v1666
    %v1683 = vpack.c.bf16 %v1667, %v1667
    %v1684 = vpack.c.bf16 %v1668, %v1668
    %v1685 = vpack.c.bf16 %v1669, %v1669
    %v1686 = vpack.c.bf16 %v1670, %v1670
    %v1687 = vpack.c.bf16 %v1671, %v1671
    %v1688 = vpack.c.bf16 %v1672, %v1672
    %v1689 = vpack.c.bf16 %v1673, %v1673
    %v1690 = vpack.c.bf16 %v1674, %v1674
    %v1691 = vpack.c.bf16 %v1675, %v1675
    %v1692 = vpack.c.bf16 %v1676, %v1676
    %v1693 = vpack.c.bf16 %v1677, %v1677
    %v1694 = vpack.c.bf16 %v1678, %v1678
    %v1695 = vpack.c.bf16 %v1679, %v1679
    %v1696 = vpack.c.bf16 %v1680, %v1680
    %v1697 = vpack.c.bf16 %v1681, %v1681
    %s1698 = scalar_lea.vmem [#allocation7], 256
    %v1699 = vld [vmem:[%s1698] sm:$0xff]
    %v1700 = vld [vmem:[%s1698 + $0x8] sm:$0xff]
    %v1701 = vld [vmem:[%s1698 + $0x10] sm:$0xff]
    %v1702 = vld [vmem:[%s1698 + $0x18] sm:$0xff]
    %v1703 = vld [vmem:[%s1698 + $0x20] sm:$0xff]
    %v1704 = vld [vmem:[%s1698 + $0x28] sm:$0xff]
    %v1705 = vld [vmem:[%s1698 + $0x30] sm:$0xff]
    %v1706 = vld [vmem:[%s1698 + $0x38] sm:$0xff]
    %v1707 = vld [vmem:[%s1698 + $0x40] sm:$0xff]
    %v1708 = vld [vmem:[%s1698 + $0x48] sm:$0xff]
    %v1709 = vld [vmem:[%s1698 + $0x50] sm:$0xff]
    %v1710 = vld [vmem:[%s1698 + $0x58] sm:$0xff]
    %v1711 = vld [vmem:[%s1698 + $0x60] sm:$0xff]
    %v1712 = vld [vmem:[%s1698 + $0x68] sm:$0xff]
    %v1713 = vld [vmem:[%s1698 + $0x70] sm:$0xff]
    %v1714 = vld [vmem:[%s1698 + $0x78] sm:$0xff]
    %v1715 = vld [vmem:[%s1698 + $0x80] sm:$0xff]
    %v1716 = vld [vmem:[%s1698 + $0x88] sm:$0xff]
    %v1717 = vld [vmem:[%s1698 + $0x90] sm:$0xff]
    %v1718 = vld [vmem:[%s1698 + $0x98] sm:$0xff]
    %v1719 = vld [vmem:[%s1698 + $0xa0] sm:$0xff]
    %v1720 = vld [vmem:[%s1698 + $0xa8] sm:$0xff]
    %v1721 = vld [vmem:[%s1698 + $0xb0] sm:$0xff]
    %v1722 = vld [vmem:[%s1698 + $0xb8] sm:$0xff]
    %v1723 = vld [vmem:[%s1698 + $0xc0] sm:$0xff]
    %v1724 = vld [vmem:[%s1698 + $0xc8] sm:$0xff]
    %v1725 = vld [vmem:[%s1698 + $0xd0] sm:$0xff]
    %v1726 = vld [vmem:[%s1698 + $0xd8] sm:$0xff]
    %v1727 = vld [vmem:[%s1698 + $0xe0] sm:$0xff]
    %v1728 = vld [vmem:[%s1698 + $0xe8] sm:$0xff]
    %v1729 = vld [vmem:[%s1698 + $0xf0] sm:$0xff]
    %v1730 = vld [vmem:[%s1698 + $0xf8] sm:$0xff]
    %v1731 = vperm.slane %v1135, 5
    %v1764 = vunpack.c.l.b16 %v1699
    %v1765 = vunpack.c.h.b16 %v1699
    %v1766 = vunpack.c.l.b16 %v1700
    %v1767 = vunpack.c.h.b16 %v1700
    %v1768 = vunpack.c.l.b16 %v1701
    %v1769 = vunpack.c.h.b16 %v1701
    %v1770 = vunpack.c.l.b16 %v1702
    %v1771 = vunpack.c.h.b16 %v1702
    %v1772 = vunpack.c.l.b16 %v1703
    %v1773 = vunpack.c.h.b16 %v1703
    %v1774 = vunpack.c.l.b16 %v1704
    %v1775 = vunpack.c.h.b16 %v1704
    %v1776 = vunpack.c.l.b16 %v1705
    %v1777 = vunpack.c.h.b16 %v1705
    %v1778 = vunpack.c.l.b16 %v1706
    %v1779 = vunpack.c.h.b16 %v1706
    %v1780 = vunpack.c.l.b16 %v1707
    %v1781 = vunpack.c.h.b16 %v1707
    %v1782 = vunpack.c.l.b16 %v1708
    %v1783 = vunpack.c.h.b16 %v1708
    %v1784 = vunpack.c.l.b16 %v1709
    %v1785 = vunpack.c.h.b16 %v1709
    %v1786 = vunpack.c.l.b16 %v1710
    %v1787 = vunpack.c.h.b16 %v1710
    %v1788 = vunpack.c.l.b16 %v1711
    %v1789 = vunpack.c.h.b16 %v1711
    %v1790 = vunpack.c.l.b16 %v1712
    %v1791 = vunpack.c.h.b16 %v1712
    %v1792 = vunpack.c.l.b16 %v1713
    %v1793 = vunpack.c.h.b16 %v1713
    %v1794 = vunpack.c.l.b16 %v1714
    %v1795 = vunpack.c.h.b16 %v1714
    %v1796 = vunpack.c.l.b16 %v1715
    %v1797 = vunpack.c.h.b16 %v1715
    %v1798 = vunpack.c.l.b16 %v1716
    %v1799 = vunpack.c.h.b16 %v1716
    %v1800 = vunpack.c.l.b16 %v1717
    %v1801 = vunpack.c.h.b16 %v1717
    %v1802 = vunpack.c.l.b16 %v1718
    %v1803 = vunpack.c.h.b16 %v1718
    %v1804 = vunpack.c.l.b16 %v1719
    %v1805 = vunpack.c.h.b16 %v1719
    %v1806 = vunpack.c.l.b16 %v1720
    %v1807 = vunpack.c.h.b16 %v1720
    %v1808 = vunpack.c.l.b16 %v1721
    %v1809 = vunpack.c.h.b16 %v1721
    %v1810 = vunpack.c.l.b16 %v1722
    %v1811 = vunpack.c.h.b16 %v1722
    %v1812 = vunpack.c.l.b16 %v1723
    %v1813 = vunpack.c.h.b16 %v1723
    %v1814 = vunpack.c.l.b16 %v1724
    %v1815 = vunpack.c.h.b16 %v1724
    %v1816 = vunpack.c.l.b16 %v1725
    %v1817 = vunpack.c.h.b16 %v1725
    %v1818 = vunpack.c.l.b16 %v1726
    %v1819 = vunpack.c.h.b16 %v1726
    %v1820 = vunpack.c.l.b16 %v1727
    %v1821 = vunpack.c.h.b16 %v1727
    %v1822 = vunpack.c.l.b16 %v1728
    %v1823 = vunpack.c.h.b16 %v1728
    %v1824 = vunpack.c.l.b16 %v1729
    %v1825 = vunpack.c.h.b16 %v1729
    %v1826 = vunpack.c.l.b16 %v1730
    %v1827 = vunpack.c.h.b16 %v1730
    %v1828 = vpack.c.b16 %v1780, %v1764
    %v1829 = vpack.c.b16 %v1781, %v1765
    %v1830 = vpack.c.b16 %v1782, %v1766
    %v1831 = vpack.c.b16 %v1783, %v1767
    %v1832 = vpack.c.b16 %v1784, %v1768
    %v1833 = vpack.c.b16 %v1785, %v1769
    %v1834 = vpack.c.b16 %v1786, %v1770
    %v1835 = vpack.c.b16 %v1787, %v1771
    %v1836 = vpack.c.b16 %v1788, %v1772
    %v1837 = vpack.c.b16 %v1789, %v1773
    %v1838 = vpack.c.b16 %v1790, %v1774
    %v1839 = vpack.c.b16 %v1791, %v1775
    %v1840 = vpack.c.b16 %v1792, %v1776
    %v1841 = vpack.c.b16 %v1793, %v1777
    %v1842 = vpack.c.b16 %v1794, %v1778
    %v1843 = vpack.c.b16 %v1795, %v1779
    %v1844 = vpack.c.b16 %v1812, %v1796
    %v1845 = vpack.c.b16 %v1813, %v1797
    %v1846 = vpack.c.b16 %v1814, %v1798
    %v1847 = vpack.c.b16 %v1815, %v1799
    %v1848 = vpack.c.b16 %v1816, %v1800
    %v1849 = vpack.c.b16 %v1817, %v1801
    %v1850 = vpack.c.b16 %v1818, %v1802
    %v1851 = vpack.c.b16 %v1819, %v1803
    %v1852 = vpack.c.b16 %v1820, %v1804
    %v1853 = vpack.c.b16 %v1821, %v1805
    %v1854 = vpack.c.b16 %v1822, %v1806
    %v1855 = vpack.c.b16 %v1823, %v1807
    %v1856 = vpack.c.b16 %v1824, %v1808
    %v1857 = vpack.c.b16 %v1825, %v1809
    %v1858 = vpack.c.b16 %v1826, %v1810
    %v1859 = vpack.c.b16 %v1827, %v1811
    %1892 = vmatpush.bf16.xpose.msra.mxu0 0
    %1893 = vmatpush.bf16.xpose.msra.mxu0 0
    %1894 = vmatpush.bf16.xpose.msra.mxu0 0
    %1895 = vmatpush.bf16.xpose.msra.mxu0 0
    %1896 = vmatpush.bf16.xpose.msra.mxu0 0
    %1897 = vmatpush.bf16.xpose.msra.mxu0 0
    %1898 = vmatpush.bf16.xpose.msra.mxu0 %v1844
    %1899 = vmatpush.bf16.xpose.msra.mxu0 %v1828
    %1900 = vmatmul.bf16.gmra.mxu0 %v1682
    %v1901 = vpop.f32.mrf.mxu0
    %v1902 = vadd.f32 %v1731, %v1901
    %v1903 = vpop.f32.mrf.mxu0
    %1904 = vdwg.mxu0
    %1905 = vmatpush.bf16.xpose.msra.mxu0 0
    %1906 = vmatpush.bf16.xpose.msra.mxu0 0
    %1907 = vmatpush.bf16.xpose.msra.mxu0 0
    %1908 = vmatpush.bf16.xpose.msra.mxu0 0
    %1909 = vmatpush.bf16.xpose.msra.mxu0 0
    %1910 = vmatpush.bf16.xpose.msra.mxu0 0
    %1911 = vmatpush.bf16.xpose.msra.mxu0 %v1845
    %1912 = vmatpush.bf16.xpose.msra.mxu0 %v1829
    %1913 = vmatmul.bf16.gmra.mxu0 %v1683
    %v1914 = vpop.f32.mrf.mxu0
    %v1915 = vadd.f32 %v1902, %v1914
    %v1916 = vpop.f32.mrf.mxu0
    %1917 = vdwg.mxu0
    %1918 = vmatpush.bf16.xpose.msra.mxu0 0
    %1919 = vmatpush.bf16.xpose.msra.mxu0 0
    %1920 = vmatpush.bf16.xpose.msra.mxu0 0
    %1921 = vmatpush.bf16.xpose.msra.mxu0 0
    %1922 = vmatpush.bf16.xpose.msra.mxu0 0
    %1923 = vmatpush.bf16.xpose.msra.mxu0 0
    %1924 = vmatpush.bf16.xpose.msra.mxu0 %v1846
    %1925 = vmatpush.bf16.xpose.msra.mxu0 %v1830
    %1926 = vmatmul.bf16.gmra.mxu0 %v1684
    %v1927 = vpop.f32.mrf.mxu0
    %v1928 = vadd.f32 %v1915, %v1927
    %v1929 = vpop.f32.mrf.mxu0
    %1930 = vdwg.mxu0
    %1931 = vmatpush.bf16.xpose.msra.mxu0 0
    %1932 = vmatpush.bf16.xpose.msra.mxu0 0
    %1933 = vmatpush.bf16.xpose.msra.mxu0 0
    %1934 = vmatpush.bf16.xpose.msra.mxu0 0
    %1935 = vmatpush.bf16.xpose.msra.mxu0 0
    %1936 = vmatpush.bf16.xpose.msra.mxu0 0
    %1937 = vmatpush.bf16.xpose.msra.mxu0 %v1847
    %1938 = vmatpush.bf16.xpose.msra.mxu0 %v1831
    %1939 = vmatmul.bf16.gmra.mxu0 %v1685
    %v1940 = vpop.f32.mrf.mxu0
    %v1941 = vadd.f32 %v1928, %v1940
    %v1942 = vpop.f32.mrf.mxu0
    %1943 = vdwg.mxu0
    %1944 = vmatpush.bf16.xpose.msra.mxu0 0
    %1945 = vmatpush.bf16.xpose.msra.mxu0 0
    %1946 = vmatpush.bf16.xpose.msra.mxu0 0
    %1947 = vmatpush.bf16.xpose.msra.mxu0 0
    %1948 = vmatpush.bf16.xpose.msra.mxu0 0
    %1949 = vmatpush.bf16.xpose.msra.mxu0 0
    %1950 = vmatpush.bf16.xpose.msra.mxu0 %v1848
    %1951 = vmatpush.bf16.xpose.msra.mxu0 %v1832
    %1952 = vmatmul.bf16.gmra.mxu0 %v1686
    %v1953 = vpop.f32.mrf.mxu0
    %v1954 = vadd.f32 %v1941, %v1953
    %v1955 = vpop.f32.mrf.mxu0
    %1956 = vdwg.mxu0
    %1957 = vmatpush.bf16.xpose.msra.mxu0 0
    %1958 = vmatpush.bf16.xpose.msra.mxu0 0
    %1959 = vmatpush.bf16.xpose.msra.mxu0 0
    %1960 = vmatpush.bf16.xpose.msra.mxu0 0
    %1961 = vmatpush.bf16.xpose.msra.mxu0 0
    %1962 = vmatpush.bf16.xpose.msra.mxu0 0
    %1963 = vmatpush.bf16.xpose.msra.mxu0 %v1849
    %1964 = vmatpush.bf16.xpose.msra.mxu0 %v1833
    %1965 = vmatmul.bf16.gmra.mxu0 %v1687
    %v1966 = vpop.f32.mrf.mxu0
    %v1967 = vadd.f32 %v1954, %v1966
    %v1968 = vpop.f32.mrf.mxu0
    %1969 = vdwg.mxu0
    %1970 = vmatpush.bf16.xpose.msra.mxu0 0
    %1971 = vmatpush.bf16.xpose.msra.mxu0 0
    %1972 = vmatpush.bf16.xpose.msra.mxu0 0
    %1973 = vmatpush.bf16.xpose.msra.mxu0 0
    %1974 = vmatpush.bf16.xpose.msra.mxu0 0
    %1975 = vmatpush.bf16.xpose.msra.mxu0 0
    %1976 = vmatpush.bf16.xpose.msra.mxu0 %v1850
    %1977 = vmatpush.bf16.xpose.msra.mxu0 %v1834
    %1978 = vmatmul.bf16.gmra.mxu0 %v1688
    %v1979 = vpop.f32.mrf.mxu0
    %v1980 = vadd.f32 %v1967, %v1979
    %v1981 = vpop.f32.mrf.mxu0
    %1982 = vdwg.mxu0
    %1983 = vmatpush.bf16.xpose.msra.mxu0 0
    %1984 = vmatpush.bf16.xpose.msra.mxu0 0
    %1985 = vmatpush.bf16.xpose.msra.mxu0 0
    %1986 = vmatpush.bf16.xpose.msra.mxu0 0
    %1987 = vmatpush.bf16.xpose.msra.mxu0 0
    %1988 = vmatpush.bf16.xpose.msra.mxu0 0
    %1989 = vmatpush.bf16.xpose.msra.mxu0 %v1851
    %1990 = vmatpush.bf16.xpose.msra.mxu0 %v1835
    %1991 = vmatmul.bf16.gmra.mxu0 %v1689
    %v1992 = vpop.f32.mrf.mxu0
    %v1993 = vadd.f32 %v1980, %v1992
    %v1994 = vpop.f32.mrf.mxu0
    %1995 = vdwg.mxu0
    %1996 = vmatpush.bf16.xpose.msra.mxu0 0
    %1997 = vmatpush.bf16.xpose.msra.mxu0 0
    %1998 = vmatpush.bf16.xpose.msra.mxu0 0
    %1999 = vmatpush.bf16.xpose.msra.mxu0 0
    %2000 = vmatpush.bf16.xpose.msra.mxu0 0
    %2001 = vmatpush.bf16.xpose.msra.mxu0 0
    %2002 = vmatpush.bf16.xpose.msra.mxu0 %v1852
    %2003 = vmatpush.bf16.xpose.msra.mxu0 %v1836
    %2004 = vmatmul.bf16.gmra.mxu0 %v1690
    %v2005 = vpop.f32.mrf.mxu0
    %v2006 = vadd.f32 %v1993, %v2005
    %v2007 = vpop.f32.mrf.mxu0
    %2008 = vdwg.mxu0
    %2009 = vmatpush.bf16.xpose.msra.mxu0 0
    %2010 = vmatpush.bf16.xpose.msra.mxu0 0
    %2011 = vmatpush.bf16.xpose.msra.mxu0 0
    %2012 = vmatpush.bf16.xpose.msra.mxu0 0
    %2013 = vmatpush.bf16.xpose.msra.mxu0 0
    %2014 = vmatpush.bf16.xpose.msra.mxu0 0
    %2015 = vmatpush.bf16.xpose.msra.mxu0 %v1853
    %2016 = vmatpush.bf16.xpose.msra.mxu0 %v1837
    %2017 = vmatmul.bf16.gmra.mxu0 %v1691
    %v2018 = vpop.f32.mrf.mxu0
    %v2019 = vadd.f32 %v2006, %v2018
    %v2020 = vpop.f32.mrf.mxu0
    %2021 = vdwg.mxu0
    %2022 = vmatpush.bf16.xpose.msra.mxu0 0
    %2023 = vmatpush.bf16.xpose.msra.mxu0 0
    %2024 = vmatpush.bf16.xpose.msra.mxu0 0
    %2025 = vmatpush.bf16.xpose.msra.mxu0 0
    %2026 = vmatpush.bf16.xpose.msra.mxu0 0
    %2027 = vmatpush.bf16.xpose.msra.mxu0 0
    %2028 = vmatpush.bf16.xpose.msra.mxu0 %v1854
    %2029 = vmatpush.bf16.xpose.msra.mxu0 %v1838
    %2030 = vmatmul.bf16.gmra.mxu0 %v1692
    %v2031 = vpop.f32.mrf.mxu0
    %v2032 = vadd.f32 %v2019, %v2031
    %v2033 = vpop.f32.mrf.mxu0
    %2034 = vdwg.mxu0
    %2035 = vmatpush.bf16.xpose.msra.mxu0 0
    %2036 = vmatpush.bf16.xpose.msra.mxu0 0
    %2037 = vmatpush.bf16.xpose.msra.mxu0 0
    %2038 = vmatpush.bf16.xpose.msra.mxu0 0
    %2039 = vmatpush.bf16.xpose.msra.mxu0 0
    %2040 = vmatpush.bf16.xpose.msra.mxu0 0
    %2041 = vmatpush.bf16.xpose.msra.mxu0 %v1855
    %2042 = vmatpush.bf16.xpose.msra.mxu0 %v1839
    %2043 = vmatmul.bf16.gmra.mxu0 %v1693
    %v2044 = vpop.f32.mrf.mxu0
    %v2045 = vadd.f32 %v2032, %v2044
    %v2046 = vpop.f32.mrf.mxu0
    %2047 = vdwg.mxu0
    %2048 = vmatpush.bf16.xpose.msra.mxu0 0
    %2049 = vmatpush.bf16.xpose.msra.mxu0 0
    %2050 = vmatpush.bf16.xpose.msra.mxu0 0
    %2051 = vmatpush.bf16.xpose.msra.mxu0 0
    %2052 = vmatpush.bf16.xpose.msra.mxu0 0
    %2053 = vmatpush.bf16.xpose.msra.mxu0 0
    %2054 = vmatpush.bf16.xpose.msra.mxu0 %v1856
    %2055 = vmatpush.bf16.xpose.msra.mxu0 %v1840
    %2056 = vmatmul.bf16.gmra.mxu0 %v1694
    %v2057 = vpop.f32.mrf.mxu0
    %v2058 = vadd.f32 %v2045, %v2057
    %v2059 = vpop.f32.mrf.mxu0
    %2060 = vdwg.mxu0
    %2061 = vmatpush.bf16.xpose.msra.mxu0 0
    %2062 = vmatpush.bf16.xpose.msra.mxu0 0
    %2063 = vmatpush.bf16.xpose.msra.mxu0 0
    %2064 = vmatpush.bf16.xpose.msra.mxu0 0
    %2065 = vmatpush.bf16.xpose.msra.mxu0 0
    %2066 = vmatpush.bf16.xpose.msra.mxu0 0
    %2067 = vmatpush.bf16.xpose.msra.mxu0 %v1857
    %2068 = vmatpush.bf16.xpose.msra.mxu0 %v1841
    %2069 = vmatmul.bf16.gmra.mxu0 %v1695
    %v2070 = vpop.f32.mrf.mxu0
    %v2071 = vadd.f32 %v2058, %v2070
    %v2072 = vpop.f32.mrf.mxu0
    %2073 = vdwg.mxu0
    %2074 = vmatpush.bf16.xpose.msra.mxu0 0
    %2075 = vmatpush.bf16.xpose.msra.mxu0 0
    %2076 = vmatpush.bf16.xpose.msra.mxu0 0
    %2077 = vmatpush.bf16.xpose.msra.mxu0 0
    %2078 = vmatpush.bf16.xpose.msra.mxu0 0
    %2079 = vmatpush.bf16.xpose.msra.mxu0 0
    %2080 = vmatpush.bf16.xpose.msra.mxu0 %v1858
    %2081 = vmatpush.bf16.xpose.msra.mxu0 %v1842
    %2082 = vmatmul.bf16.gmra.mxu0 %v1696
    %v2083 = vpop.f32.mrf.mxu0
    %v2084 = vadd.f32 %v2071, %v2083
    %v2085 = vpop.f32.mrf.mxu0
    %2086 = vdwg.mxu0
    %2087 = vmatpush.bf16.xpose.msra.mxu0 0
    %2088 = vmatpush.bf16.xpose.msra.mxu0 0
    %2089 = vmatpush.bf16.xpose.msra.mxu0 0
    %2090 = vmatpush.bf16.xpose.msra.mxu0 0
    %2091 = vmatpush.bf16.xpose.msra.mxu0 0
    %2092 = vmatpush.bf16.xpose.msra.mxu0 0
    %2093 = vmatpush.bf16.xpose.msra.mxu0 %v1859
    %2094 = vmatpush.bf16.xpose.msra.mxu0 %v1843
    %2095 = vmatmul.bf16.gmra.mxu0 %v1697
    %v2096 = vpop.f32.mrf.mxu0
    %v2097 = vadd.f32 %v2084, %v2096
    %v2098 = vpop.f32.mrf.mxu0
    %2099 = vdwg.mxu0
    %v2100 = vadd.f32 %v1223, %v2097
    %v2101 = vsel %vm157, %v2100, 0.0
    %2102 = vadd.xlane.f32.xlu0 %v2101
    %v2103 = vpop.xlane.xlu0 %2102
    %v2104 = vmul.f32 %v2103, %v184
    %v2105 = vsub.f32 %v2100, %v2104
    %v2106 = vmul.f32 %v2105, %v2105
    %v2107 = vsel %vm157, %v2106, 0.0
    %2108 = vadd.xlane.f32.xlu0 %v2107
    %v2109 = vpop.xlane.xlu0 %2108
    %v2110 = vmul.f32 %v2109, %v184
    %v2111 = vadd.f32 %v2110, 1e-05
    %v2112 = vrsqrt.pop %v2111
    %v2113 = vmul.f32 %v2112, %v2111
    %v2114 = vmul.f32 %v2113, %v2112
    %v2115 = vmul.f32 0.5, %v2114
    %v2116 = vsub.f32 1.5, %v2115
    %v2117 = vmul.f32 %v2112, %v2116
    %vm2118 = vweird.f32 %v2111
    %vm2119 = vweird.f32 %v2112
    %vm2120 = vmor %vm2118, %vm2119
    %v2121 = vsel %vm2120, %v2112, %v2117
    %v2122 = vmul.f32 %v2105, %v2121
    %v2123 = vperm.slane %v1135, 6
    %v2124 = vmul.f32 %v2122, %v2123
    %v2125 = vperm.slane %v1135, 7
    %v2126 = vadd.f32 %v2124, %v2125
    %v2127 = vpack.c.bf16 %v2126, %v2126
    %v2128 = vld [vmem:[#allocation12] sm:$0xf]
    %v2129 = vld [vmem:[#allocation12 + $0x4] sm:$0xf]
    %v2130 = vld [vmem:[#allocation12 + $0x8] sm:$0xf]
    %v2131 = vld [vmem:[#allocation12 + $0xc] sm:$0xf]
    %v2132 = vld [vmem:[%s7] sm:$0x1]
    %v2134 = vperm.slane %v2132, 0
    %v2140 = vunpack.c.l.b16 %v2128
    %v2141 = vunpack.c.l.b16 %v2129
    %v2142 = vunpack.c.l.b16 %v2130
    %v2143 = vunpack.c.l.b16 %v2131
    %v2144 = vpack.c.b16 %v2141, %v2140
    %v2145 = vpack.c.b16 %v2143, %v2142
    %v2149 = vsel %vm157, %v2127, 0
    %2151 = vmatpush.bf16.msra.mxu0 0
    %2152 = vmatpush.bf16.msra.mxu0 0
    %2153 = vmatpush.bf16.msra.mxu0 0
    %2154 = vmatpush.bf16.msra.mxu0 0
    %2155 = vmatpush.bf16.msra.mxu0 0
    %2156 = vmatpush.bf16.msra.mxu0 0
    %2157 = vmatpush.bf16.msra.mxu0 %v2145
    %2158 = vmatpush.bf16.msra.mxu0 %v2144
    %2159 = vmatmul.bf16.gmra.mxu0 %v2149
    %v2160 = vpop.f32.mrf.mxu0
    %v2161 = vadd.f32 %v2134, %v2160
    %v2162 = vpop.f32.mrf.mxu0
    %2163 = vdwg.mxu0
    %2164 = vst [vmem:[%s8] sm:$0xff] %v2161
    // Predicated region
    $region62: #{quantity_decoder_forward.1} parent=1 // pred_check
      _
    $region63: #{quantity_decoder_forward.1} parent=1 // pred_check_branch
      %2166 = sbr.rel (0) target = $region65
    $region64: #{quantity_decoder_forward.1} parent=1 // pred_region
      _
    $region65: #{quantity_decoder_forward.1} parent=1 // pred_fallthru
      _
    // Predicated region
    $region66: #{quantity_decoder_forward.1} parent=1 // pred_check
      _
    $region67: #{quantity_decoder_forward.1} parent=1 // pred_check_branch
      %2168 = sbr.rel (0) target = $region69
    $region68: #{quantity_decoder_forward.1} parent=1 // pred_region
      _
    $region69: #{quantity_decoder_forward.1} parent=1 // pred_fallthru
      _
    %2169 = vsyncpa [#allocation3], 1
    %2170 = vsyncpa [#allocation5], 1
    %2171 = vsyncpa [#allocation8], 1
    %2172 = vsyncpa [#allocation11], 1

</llo_original>
